<compile_context>
chip_gen: v7x
topology: tpu7x:2x2x1
jax: 0.10.0
libtpu: 0.0.40
codegen_flags: <defaults>
</compile_context>

<pallas_src>
import functools
import math

import jax
import jax.numpy as jnp
from jax import lax
from jax.experimental import pallas as pl
from jax.experimental.pallas import tpu as pltpu

LN_EPS = 1e-6  # layer_norm_fn default eps (gamma=1, beta=0 at init)


# --------------------------------------------------------------------------
# Stage 1: fused q/k/v projection + per-head feature map (LayerNorm) + v-aug
# --------------------------------------------------------------------------
def _proj_kernel(x_ref, wq_ref, wk_ref, wv_ref, g_ref, b_ref,
                 qf_ref, kf_ref, va_ref, *, H, F, Dh, scale):
    # x_ref: (1, TL, D)   wq/wk: (D, H*F)   wv: (D, H*Dh)   g/b: (1, F)
    # qf/kf: (1, H, TL, F)   va: (1, H, TL, Dh+1)
    x = x_ref[0]                                                        # (TL, D)
    q = jnp.dot(x, wq_ref[...], preferred_element_type=jnp.float32)    # (TL, H*F)
    k = jnp.dot(x, wk_ref[...], preferred_element_type=jnp.float32)    # (TL, H*F)
    v = jnp.dot(x, wv_ref[...], preferred_element_type=jnp.float32)    # (TL, H*Dh)

    gamma = g_ref[...].astype(jnp.float32)                              # (1, F)
    beta = b_ref[...].astype(jnp.float32)                               # (1, F)
    ones = jnp.ones((x.shape[0], 1), jnp.float32)

    def layer_norm(t):                      # (TL, F), biased variance (torch LN)
        mu = jnp.mean(t, axis=-1, keepdims=True)
        var = jnp.mean(jnp.square(t - mu), axis=-1, keepdims=True)
        return (t - mu) * lax.rsqrt(var + LN_EPS) * gamma + beta

    for h in range(H):                      # static unroll over heads
        qh = layer_norm(q[:, h * F:(h + 1) * F]) * scale   # q pre-scaled (F**-0.5)
        kh = layer_norm(k[:, h * F:(h + 1) * F])
        vh = v[:, h * Dh:(h + 1) * Dh]
        qf_ref[0, h, :, :] = qh.astype(qf_ref.dtype)
        kf_ref[0, h, :, :] = kh.astype(kf_ref.dtype)
        va_ref[0, h, :, :Dh] = vh.astype(va_ref.dtype)
        va_ref[0, h, :, Dh:] = ones.astype(va_ref.dtype)   # ones column -> denominator


# --------------------------------------------------------------------------
# Stage 2: causal squared-kernel linear attention + fused head-merge / o_proj
# --------------------------------------------------------------------------
def _attn_kernel(qf_ref, kf_ref, va_ref, wo_ref, o_ref, acc_ref, oacc_ref,
                 *, eps, Dh):
    # qf/kf: (1, 1, TQ, F)   va: (1, 1, TQ, Dh+1)   wo: (1, Dh, D)   o: (1, TQ, D)
    # acc:   (TQ, Dh+1) f32 running [numerator | denominator] for current head
    # oacc:  (TQ, D)    f32 cross-head accumulator of o_h @ Wo_h
    qi = pl.program_id(1)
    h = pl.program_id(2)
    kv = pl.program_id(3)
    num_heads = pl.num_programs(2)

    @pl.when(kv <= qi)          # causal block skip: upper-triangular tiles are no-ops
    def _():
        @pl.when(kv == 0)
        def _():
            acc_ref[...] = jnp.zeros_like(acc_ref)

            @pl.when(h == 0)
            def _():
                oacc_ref[...] = jnp.zeros_like(oacc_ref)

        q = qf_ref[0, 0]        # (TQ, F)
        k = kf_ref[0, 0]        # (TK, F)
        v = va_ref[0, 0]        # (TK, Dh+1), last column is ones

        # s = q @ k^T via dot_general (contract feature dims, no materialized k.T)
        s = lax.dot_general(q, k, (((1,), (1,)), ((), ())),
                            preferred_element_type=jnp.float32)         # (TQ, TK)
        s2 = s * s

        @pl.when(kv < qi)       # fully-below-diagonal block: no mask needed
        def _():
            acc_ref[...] += jnp.dot(s2.astype(v.dtype), v,
                                    preferred_element_type=jnp.float32)

        @pl.when(kv == qi)      # diagonal block: mask, then finalize this head
        def _():
            tq, tk = s2.shape
            row = lax.broadcasted_iota(jnp.int32, (tq, tk), 0)
            col = lax.broadcasted_iota(jnp.int32, (tq, tk), 1)
            sm = jnp.where(col <= row, s2, 0.0)
            acc = acc_ref[...] + jnp.dot(sm.astype(v.dtype), v,
                                         preferred_element_type=jnp.float32)
            num = acc[:, :Dh]                               # (TQ, Dh)
            den = acc[:, Dh:Dh + 1] + eps                   # (TQ, 1)
            r = pl.reciprocal(den, approx=True)             # EUP reciprocal
            r = r * (2.0 - den * r)                         # 1 Newton step -> f32 accuracy
            o_h = num * r                                   # (TQ, Dh)
            w = wo_ref[0]                                   # (Dh, D)
            oacc_ref[...] += jnp.dot(o_h.astype(w.dtype), w,
                                     preferred_element_type=jnp.float32)

            @pl.when(h == num_heads - 1)                    # last head -> lane-dense store
            def _():
                o_ref[0] = oacc_ref[...].astype(o_ref.dtype)


# --------------------------------------------------------------------------
# Wrapper
# --------------------------------------------------------------------------
def rebased_linear_attention(x, wq_t, wk_t, wv_t, gamma, beta, wo_t, *,
                             eps=1e-5, block_l=256, block_q=256, mm_dtype=None):
    """ReBased linear attention ('parallel' mode) forward pass.

    x:      [B, L, D]
    wq_t:   [D, H*F]   (= q_proj.weight.T)
    wk_t:   [D, H*F]   (= k_proj.weight.T)
    wv_t:   [D, H*Dh]  (= v_proj.weight.T)
    gamma:  [F] or [1, F]  (feature-map LayerNorm weight)
    beta:   [F] or [1, F]  (feature-map LayerNorm bias)
    wo_t:   [H*Dh, D_out]  (= o_proj.weight.T)
    """
    B, L, D = x.shape
    gamma = gamma.reshape(1, -1).astype(jnp.float32)
    beta = beta.reshape(1, -1).astype(jnp.float32)
    F = gamma.shape[-1]
    H = wq_t.shape[1] // F
    Dh = wv_t.shape[1] // H
    D_out = wo_t.shape[1]
    assert wq_t.shape == (D, H * F) and wk_t.shape == (D, H * F)
    assert wv_t.shape == (D, H * Dh) and wo_t.shape == (H * Dh, D_out)

    if mm_dtype is None:
        mm_dtype = x.dtype          # pass bf16 inputs for bf16 MXU ops (f32 accumulate)
    scale = F ** -0.5

    TL = min(block_l, L)
    TQ = min(block_q, L)
    assert L % TL == 0 and L % TQ == 0, "sequence length must divide the block sizes"
    NL = L // TL
    NQ = L // TQ

    itm = jnp.dtype(mm_dtype).itemsize

    # ---------------- Stage 1: projections + feature map ----------------
    proj_cost = pl.CostEstimate(
        flops=int(2 * B * L * D * H * (2 * F + Dh) + 12 * B * L * H * F),
        transcendentals=int(2 * B * L * H),
        bytes_accessed=int(x.size * x.dtype.itemsize
                           + (wq_t.size + wk_t.size + wv_t.size) * wq_t.dtype.itemsize
                           + B * H * L * (2 * F + Dh + 1) * itm),
    )
    qf, kf, va = pl.pallas_call(
        functools.partial(_proj_kernel, H=H, F=F, Dh=Dh, scale=scale),
        grid=(B, NL),
        in_specs=[
            pl.BlockSpec((1, TL, D), lambda b, l: (b, l, 0)),
            pl.BlockSpec((D, H * F), lambda b, l: (0, 0)),
            pl.BlockSpec((D, H * F), lambda b, l: (0, 0)),
            pl.BlockSpec((D, H * Dh), lambda b, l: (0, 0)),
            pl.BlockSpec((1, F), lambda b, l: (0, 0)),
            pl.BlockSpec((1, F), lambda b, l: (0, 0)),
        ],
        out_specs=[
            pl.BlockSpec((1, H, TL, F), lambda b, l: (b, 0, l, 0)),
            pl.BlockSpec((1, H, TL, F), lambda b, l: (b, 0, l, 0)),
            pl.BlockSpec((1, H, TL, Dh + 1), lambda b, l: (b, 0, l, 0)),
        ],
        out_shape=[
            jax.ShapeDtypeStruct((B, H, L, F), mm_dtype),
            jax.ShapeDtypeStruct((B, H, L, F), mm_dtype),
            jax.ShapeDtypeStruct((B, H, L, Dh + 1), mm_dtype),
        ],
        compiler_params=pltpu.CompilerParams(
            dimension_semantics=("parallel", "parallel"),
            vmem_limit_bytes=32 * 1024 * 1024),
        cost_estimate=proj_cost,
    )(x, wq_t, wk_t, wv_t, gamma, beta)

    # ------------- Stage 2: flash-style attention + fused o_proj -------------
    wo_h = wo_t.reshape(H, Dh, D_out)
    attn_cost = pl.CostEstimate(
        flops=int(B * H * L * L * (2 * F + 2 * (Dh + 1) + 3) // 2
                  + 2 * B * H * L * Dh * D_out),
        transcendentals=int(B * H * L),
        bytes_accessed=int(B * H * L * (2 * F + Dh + 1) * itm * (NQ + 1) // 2
                           + wo_h.size * wo_h.dtype.itemsize
                           + B * L * D_out * x.dtype.itemsize),
    )
    y = pl.pallas_call(
        functools.partial(_attn_kernel, eps=eps, Dh=Dh),
        grid=(B, NQ, H, NQ),
        in_specs=[
            pl.BlockSpec((1, 1, TQ, F), lambda b, qi, h, kv: (b, h, qi, 0)),
            # min(kv, qi): skipped upper-triangular steps keep the previous block
            # index, so Pallas does not DMA unused k/v tiles.
            pl.BlockSpec((1, 1, TQ, F),
                         lambda b, qi, h, kv: (b, h, jnp.minimum(kv, qi), 0)),
            pl.BlockSpec((1, 1, TQ, Dh + 1),
                         lambda b, qi, h, kv: (b, h, jnp.minimum(kv, qi), 0)),
            pl.BlockSpec((1, Dh, D_out), lambda b, qi, h, kv: (h, 0, 0)),
        ],
        out_specs=pl.BlockSpec((1, TQ, D_out), lambda b, qi, h, kv: (b, qi, 0)),
        out_shape=jax.ShapeDtypeStruct((B, L, D_out), x.dtype),
        scratch_shapes=[
            pltpu.VMEM((TQ, Dh + 1), jnp.float32),   # per-head [num | den] accumulator
            pltpu.VMEM((TQ, D_out), jnp.float32),    # cross-head o_proj accumulator
        ],
        compiler_params=pltpu.CompilerParams(
            dimension_semantics=("parallel", "parallel", "arbitrary", "arbitrary"),
            vmem_limit_bytes=32 * 1024 * 1024),
        cost_estimate=attn_cost,
    )(qf, kf, va, wo_h)
    return y


# --------------------------------------------------------------------------
# Reference + test harness
# --------------------------------------------------------------------------
def _xavier_uniform(key, shape, gain):
    fan_out, fan_in = shape  # torch Linear weight is (out_features, in_features)
    bound = gain * math.sqrt(6.0 / (fan_in + fan_out))
    return jax.random.uniform(key, shape, jnp.float32, -bound, bound)


def _reference(x, Wq, Wk, Wv, Wo, gamma, beta, H, F, Dh, eps):
    P = jax.lax.Precision.HIGHEST
    B, L, D = x.shape
    q = jnp.einsum('bld,ed->ble', x, Wq, precision=P).reshape(B, L, H, F).transpose(0, 2, 1, 3)
    k = jnp.einsum('bld,ed->ble', x, Wk, precision=P).reshape(B, L, H, F).transpose(0, 2, 1, 3)
    v = jnp.einsum('bld,ed->ble', x, Wv, precision=P).reshape(B, L, H, Dh).transpose(0, 2, 1, 3)

    def ln(t):
        mu = t.mean(-1, keepdims=True)
        var = ((t - mu) ** 2).mean(-1, keepdims=True)
        return (t - mu) / jnp.sqrt(var + LN_EPS) * gamma.reshape(-1) + beta.reshape(-1)

    q = ln(q) * F ** -0.5
    k = ln(k)
    s = jnp.einsum('bhif,bhjf->bhij', q, k, precision=P) ** 2
    mask = jnp.tril(jnp.ones((L, L), bool))
    s = jnp.where(mask, s, 0.0)
    num = jnp.einsum('bhij,bhjd->bhid', s, v, precision=P)
    den = s.sum(-1, keepdims=True)
    o = num / (den + eps)
    o = o.transpose(0, 2, 1, 3).reshape(B, L, H * Dh)
    return jnp.einsum('blk,dk->bld', o, Wo, precision=P)


def _run_case(key, B, L, hidden_size, num_heads, feature_dim, block_l, block_q, tol):
    num_kv_heads = num_heads
    head_dim = hidden_size // num_kv_heads
    eps = 1e-5
    gain = 2.0 ** (-2.5)

    kx, kq, kk, kv, ko = jax.random.split(key, 5)
    x = jax.random.normal(kx, (B, L, hidden_size), jnp.float32)
    Wq = _xavier_uniform(kq, (num_heads * feature_dim, hidden_size), gain)
    Wk = _xavier_uniform(kk, (num_heads * feature_dim, hidden_size), gain)
    Wv = _xavier_uniform(kv, (num_kv_heads * head_dim, hidden_size), gain)
    Wo = _xavier_uniform(ko, (hidden_size, num_heads * head_dim), gain)
    gamma = jnp.ones((1, feature_dim), jnp.float32)   # RebasedFeatureMap init
    beta = jnp.zeros((1, feature_dim), jnp.float32)

    out = rebased_linear_attention(x, Wq.T, Wk.T, Wv.T, gamma, beta, Wo.T,
                                   eps=eps, block_l=block_l, block_q=block_q)
    out = jax.block_until_ready(out)

    ref = _reference(x, Wq, Wk, Wv, Wo, gamma, beta,
                     num_heads, feature_dim, head_dim, eps)
    assert out.shape == (B, L, hidden_size)
    err = float(jnp.max(jnp.abs(out - ref)))
    assert jnp.allclose(out, ref, rtol=tol, atol=tol), f"mismatch vs reference: {err}"


if __name__ == "__main__":
    key = jax.random.PRNGKey(0)
    k1, k2 = jax.random.split(key)

    # Small config consistent with the module (hidden=32, heads=4, feature_dim=16,
    # head_dim=8, batch=2, seq=8): single tile per axis.
    _run_case(k1, B=2, L=8, hidden_size=32, num_heads=4, feature_dim=16,
              block_l=8, block_q=8, tol=5e-4)

    # Multi-tile config exercising the flash-style tiling, causal block skipping,
    # diagonal-only masking and the cross-head fused-o_proj accumulation
    # (2 q-tiles x 2 kv-tiles x 4 heads x 2 batches).
    _run_case(k2, B=2, L=256, hidden_size=128, num_heads=4, feature_dim=16,
              block_l=128, block_q=128, tol=1e-3)

    print("KERNEL_OK")
</pallas_src>

<mosaic_0001>
module attributes {stable_mosaic.version = 11 : i64} {
  func.func @_proj_kernel(%arg0: i32, %arg1: i32, %arg2: memref<1x8x32xf32, #tpu.memory_space<vmem>>, %arg3: memref<32x64xf32, #tpu.memory_space<vmem>>, %arg4: memref<32x64xf32, #tpu.memory_space<vmem>>, %arg5: memref<32x32xf32, #tpu.memory_space<vmem>>, %arg6: memref<1x16xf32, #tpu.memory_space<vmem>>, %arg7: memref<1x16xf32, #tpu.memory_space<vmem>>, %arg8: memref<1x4x8x16xf32, #tpu.memory_space<vmem>>, %arg9: memref<1x4x8x16xf32, #tpu.memory_space<vmem>>, %arg10: memref<1x4x8x9xf32, #tpu.memory_space<vmem>>) attributes {dimension_semantics = [#tpu.dimension_semantics<parallel>, #tpu.dimension_semantics<parallel>], iteration_bounds = array<i64: 2, 1>, scalar_prefetch = 0 : i64, scratch_operands = 0 : i64, tpu.core_type = #tpu.core_type<tc>, window_params = [{transform_indices = @transform_0, window_bounds = array<i64: 1, 8, 32>}, {pipeline_mode = #tpu.pipeline_mode<synchronous>, transform_indices = @transform_1, window_bounds = array<i64: 32, 64>}, {pipeline_mode = #tpu.pipeline_mode<synchronous>, transform_indices = @transform_2, window_bounds = array<i64: 32, 64>}, {pipeline_mode = #tpu.pipeline_mode<synchronous>, transform_indices = @transform_3, window_bounds = array<i64: 32, 32>}, {pipeline_mode = #tpu.pipeline_mode<synchronous>, transform_indices = @transform_4, window_bounds = array<i64: 1, 16>}, {pipeline_mode = #tpu.pipeline_mode<synchronous>, transform_indices = @transform_5, window_bounds = array<i64: 1, 16>}, {transform_indices = @transform_6, window_bounds = array<i64: 1, 4, 8, 16>}, {transform_indices = @transform_7, window_bounds = array<i64: 1, 4, 8, 16>}, {transform_indices = @transform_8, window_bounds = array<i64: 1, 4, 8, 9>}]} {
    %c0 = arith.constant 0 : index
    %c0_0 = arith.constant 0 : index
    %c0_1 = arith.constant 0 : index
    %0 = vector.load %arg2[%c0, %c0_0, %c0_1] : memref<1x8x32xf32, #tpu.memory_space<vmem>>, vector<1x8x32xf32>
    %1 = vector.shape_cast %0 : vector<1x8x32xf32> to vector<8x32xf32>
    %c0_2 = arith.constant 0 : index
    %c0_3 = arith.constant 0 : index
    %2 = vector.load %arg3[%c0_2, %c0_3] : memref<32x64xf32, #tpu.memory_space<vmem>>, vector<32x64xf32>
    %cst = arith.constant dense<0.000000e+00> : vector<8x64xf32>
    %3 = tpu.matmul %1, %2, %cst {dimension_numbers = #tpu.dot_dimension_numbers<[1], [0], [0], [1], [0, 0, 1, 1], [], []>} : vector<8x32xf32>, vector<32x64xf32>, vector<8x64xf32> -> vector<8x64xf32>
    %c0_4 = arith.constant 0 : index
    %c0_5 = arith.constant 0 : index
    %4 = vector.load %arg4[%c0_4, %c0_5] : memref<32x64xf32, #tpu.memory_space<vmem>>, vector<32x64xf32>
    %cst_6 = arith.constant dense<0.000000e+00> : vector<8x64xf32>
    %5 = tpu.matmul %1, %4, %cst_6 {dimension_numbers = #tpu.dot_dimension_numbers<[1], [0], [0], [1], [0, 0, 1, 1], [], []>} : vector<8x32xf32>, vector<32x64xf32>, vector<8x64xf32> -> vector<8x64xf32>
    %c0_7 = arith.constant 0 : index
    %c0_8 = arith.constant 0 : index
    %6 = vector.load %arg5[%c0_7, %c0_8] : memref<32x32xf32, #tpu.memory_space<vmem>>, vector<32x32xf32>
    %cst_9 = arith.constant dense<0.000000e+00> : vector<8x32xf32>
    %7 = tpu.matmul %1, %6, %cst_9 {dimension_numbers = #tpu.dot_dimension_numbers<[1], [0], [0], [1], [0, 0, 1, 1], [], []>} : vector<8x32xf32>, vector<32x32xf32>, vector<8x32xf32> -> vector<8x32xf32>
    %c0_10 = arith.constant 0 : index
    %c0_11 = arith.constant 0 : index
    %8 = vector.load %arg6[%c0_10, %c0_11] : memref<1x16xf32, #tpu.memory_space<vmem>>, vector<1x16xf32>
    %c0_12 = arith.constant 0 : index
    %c0_13 = arith.constant 0 : index
    %9 = vector.load %arg7[%c0_12, %c0_13] : memref<1x16xf32, #tpu.memory_space<vmem>>, vector<1x16xf32>
    %cst_14 = arith.constant 1.000000e+00 : f32
    %10 = vector.broadcast %cst_14 : f32 to vector<8x1xf32>
    %11 = vector.extract_strided_slice %3 {offsets = [0, 0], sizes = [8, 16], strides = [1, 1]} : vector<8x64xf32> to vector<8x16xf32>
    %cst_15 = arith.constant dense<0.000000e+00> : vector<8xf32>
    %12 = vector.multi_reduction <add>, %11, %cst_15 [1] : vector<8x16xf32> to vector<8xf32>
    %13 = vector.shape_cast %12 : vector<8xf32> to vector<8x1xf32>
    %cst_16 = arith.constant 1.600000e+01 : f32
    %14 = vector.broadcast %cst_16 : f32 to vector<8x1xf32>
    %15 = arith.divf %13, %14 : vector<8x1xf32>
    %16 = vector.broadcast %15 : vector<8x1xf32> to vector<8x16xf32>
    %17 = arith.subf %11, %16 : vector<8x16xf32>
    %18 = arith.mulf %17, %17 : vector<8x16xf32>
    %cst_17 = arith.constant dense<0.000000e+00> : vector<8xf32>
    %19 = vector.multi_reduction <add>, %18, %cst_17 [1] : vector<8x16xf32> to vector<8xf32>
    %20 = vector.shape_cast %19 : vector<8xf32> to vector<8x1xf32>
    %cst_18 = arith.constant 1.600000e+01 : f32
    %21 = vector.broadcast %cst_18 : f32 to vector<8x1xf32>
    %22 = arith.divf %20, %21 : vector<8x1xf32>
    %23 = vector.broadcast %15 : vector<8x1xf32> to vector<8x16xf32>
    %24 = arith.subf %11, %23 : vector<8x16xf32>
    %cst_19 = arith.constant 9.99999997E-7 : f32
    %25 = vector.broadcast %cst_19 : f32 to vector<8x1xf32>
    %26 = arith.addf %22, %25 : vector<8x1xf32>
    %27 = math.rsqrt %26 : vector<8x1xf32>
    %28 = vector.broadcast %27 : vector<8x1xf32> to vector<8x16xf32>
    %29 = arith.mulf %24, %28 : vector<8x16xf32>
    %30 = vector.broadcast %8 : vector<1x16xf32> to vector<8x16xf32>
    %31 = arith.mulf %29, %30 : vector<8x16xf32>
    %32 = vector.broadcast %9 : vector<1x16xf32> to vector<8x16xf32>
    %33 = arith.addf %31, %32 : vector<8x16xf32>
    %cst_20 = arith.constant 2.500000e-01 : f32
    %34 = vector.broadcast %cst_20 : f32 to vector<8x16xf32>
    %35 = arith.mulf %33, %34 : vector<8x16xf32>
    %36 = vector.extract_strided_slice %5 {offsets = [0, 0], sizes = [8, 16], strides = [1, 1]} : vector<8x64xf32> to vector<8x16xf32>
    %cst_21 = arith.constant dense<0.000000e+00> : vector<8xf32>
    %37 = vector.multi_reduction <add>, %36, %cst_21 [1] : vector<8x16xf32> to vector<8xf32>
    %38 = vector.shape_cast %37 : vector<8xf32> to vector<8x1xf32>
    %cst_22 = arith.constant 1.600000e+01 : f32
    %39 = vector.broadcast %cst_22 : f32 to vector<8x1xf32>
    %40 = arith.divf %38, %39 : vector<8x1xf32>
    %41 = vector.broadcast %40 : vector<8x1xf32> to vector<8x16xf32>
    %42 = arith.subf %36, %41 : vector<8x16xf32>
    %43 = arith.mulf %42, %42 : vector<8x16xf32>
    %cst_23 = arith.constant dense<0.000000e+00> : vector<8xf32>
    %44 = vector.multi_reduction <add>, %43, %cst_23 [1] : vector<8x16xf32> to vector<8xf32>
    %45 = vector.shape_cast %44 : vector<8xf32> to vector<8x1xf32>
    %cst_24 = arith.constant 1.600000e+01 : f32
    %46 = vector.broadcast %cst_24 : f32 to vector<8x1xf32>
    %47 = arith.divf %45, %46 : vector<8x1xf32>
    %48 = vector.broadcast %40 : vector<8x1xf32> to vector<8x16xf32>
    %49 = arith.subf %36, %48 : vector<8x16xf32>
    %cst_25 = arith.constant 9.99999997E-7 : f32
    %50 = vector.broadcast %cst_25 : f32 to vector<8x1xf32>
    %51 = arith.addf %47, %50 : vector<8x1xf32>
    %52 = math.rsqrt %51 : vector<8x1xf32>
    %53 = vector.broadcast %52 : vector<8x1xf32> to vector<8x16xf32>
    %54 = arith.mulf %49, %53 : vector<8x16xf32>
    %55 = vector.broadcast %8 : vector<1x16xf32> to vector<8x16xf32>
    %56 = arith.mulf %54, %55 : vector<8x16xf32>
    %57 = vector.broadcast %9 : vector<1x16xf32> to vector<8x16xf32>
    %58 = arith.addf %56, %57 : vector<8x16xf32>
    %59 = vector.extract_strided_slice %7 {offsets = [0, 0], sizes = [8, 8], strides = [1, 1]} : vector<8x32xf32> to vector<8x8xf32>
    %c0_26 = arith.constant 0 : index
    %c0_27 = arith.constant 0 : index
    %c0_28 = arith.constant 0 : index
    %c0_29 = arith.constant 0 : index
    %60 = vector.load %arg8[%c0_26, %c0_27, %c0_28, %c0_29] : memref<1x4x8x16xf32, #tpu.memory_space<vmem>>, vector<1x1x8x16xf32>
    %61 = vector.shape_cast %60 : vector<1x1x8x16xf32> to vector<8x16xf32>
    %62 = vector.shape_cast %35 : vector<8x16xf32> to vector<1x1x8x16xf32>
    tpu.vector_store %arg8[%c0_26, %c0_27, %c0_28, %c0_29], %62 {strides = array<i32>} : memref<1x4x8x16xf32, #tpu.memory_space<vmem>>, vector<1x1x8x16xf32>,
    %c0_30 = arith.constant 0 : index
    %c0_31 = arith.constant 0 : index
    %c0_32 = arith.constant 0 : index
    %c0_33 = arith.constant 0 : index
    %63 = vector.load %arg9[%c0_30, %c0_31, %c0_32, %c0_33] : memref<1x4x8x16xf32, #tpu.memory_space<vmem>>, vector<1x1x8x16xf32>
    %64 = vector.shape_cast %63 : vector<1x1x8x16xf32> to vector<8x16xf32>
    %65 = vector.shape_cast %58 : vector<8x16xf32> to vector<1x1x8x16xf32>
    tpu.vector_store %arg9[%c0_30, %c0_31, %c0_32, %c0_33], %65 {strides = array<i32>} : memref<1x4x8x16xf32, #tpu.memory_space<vmem>>, vector<1x1x8x16xf32>,
    %c0_34 = arith.constant 0 : index
    %c0_35 = arith.constant 0 : index
    %c0_36 = arith.constant 0 : index
    %c0_37 = arith.constant 0 : index
    %66 = vector.load %arg10[%c0_34, %c0_35, %c0_36, %c0_37] : memref<1x4x8x9xf32, #tpu.memory_space<vmem>>, vector<1x1x8x8xf32>
    %67 = vector.shape_cast %66 : vector<1x1x8x8xf32> to vector<8x8xf32>
    %68 = vector.shape_cast %59 : vector<8x8xf32> to vector<1x1x8x8xf32>
    tpu.vector_store %arg10[%c0_34, %c0_35, %c0_36, %c0_37], %68 {strides = array<i32>} : memref<1x4x8x9xf32, #tpu.memory_space<vmem>>, vector<1x1x8x8xf32>,
    %c0_38 = arith.constant 0 : index
    %c0_39 = arith.constant 0 : index
    %c0_40 = arith.constant 0 : index
    %c8 = arith.constant 8 : index
    %69 = vector.load %arg10[%c0_38, %c0_39, %c0_40, %c8] : memref<1x4x8x9xf32, #tpu.memory_space<vmem>>, vector<1x1x8x1xf32>
    %70 = vector.shape_cast %69 : vector<1x1x8x1xf32> to vector<8x1xf32>
    %71 = vector.shape_cast %10 : vector<8x1xf32> to vector<1x1x8x1xf32>
    tpu.vector_store %arg10[%c0_38, %c0_39, %c0_40, %c8], %71 {strides = array<i32>} : memref<1x4x8x9xf32, #tpu.memory_space<vmem>>, vector<1x1x8x1xf32>,
    %72 = vector.extract_strided_slice %3 {offsets = [0, 16], sizes = [8, 16], strides = [1, 1]} : vector<8x64xf32> to vector<8x16xf32>
    %cst_41 = arith.constant dense<0.000000e+00> : vector<8xf32>
    %73 = vector.multi_reduction <add>, %72, %cst_41 [1] : vector<8x16xf32> to vector<8xf32>
    %74 = vector.shape_cast %73 : vector<8xf32> to vector<8x1xf32>
    %cst_42 = arith.constant 1.600000e+01 : f32
    %75 = vector.broadcast %cst_42 : f32 to vector<8x1xf32>
    %76 = arith.divf %74, %75 : vector<8x1xf32>
    %77 = vector.broadcast %76 : vector<8x1xf32> to vector<8x16xf32>
    %78 = arith.subf %72, %77 : vector<8x16xf32>
    %79 = arith.mulf %78, %78 : vector<8x16xf32>
    %cst_43 = arith.constant dense<0.000000e+00> : vector<8xf32>
    %80 = vector.multi_reduction <add>, %79, %cst_43 [1] : vector<8x16xf32> to vector<8xf32>
    %81 = vector.shape_cast %80 : vector<8xf32> to vector<8x1xf32>
    %cst_44 = arith.constant 1.600000e+01 : f32
    %82 = vector.broadcast %cst_44 : f32 to vector<8x1xf32>
    %83 = arith.divf %81, %82 : vector<8x1xf32>
    %84 = vector.broadcast %76 : vector<8x1xf32> to vector<8x16xf32>
    %85 = arith.subf %72, %84 : vector<8x16xf32>
    %cst_45 = arith.constant 9.99999997E-7 : f32
    %86 = vector.broadcast %cst_45 : f32 to vector<8x1xf32>
    %87 = arith.addf %83, %86 : vector<8x1xf32>
    %88 = math.rsqrt %87 : vector<8x1xf32>
    %89 = vector.broadcast %88 : vector<8x1xf32> to vector<8x16xf32>
    %90 = arith.mulf %85, %89 : vector<8x16xf32>
    %91 = vector.broadcast %8 : vector<1x16xf32> to vector<8x16xf32>
    %92 = arith.mulf %90, %91 : vector<8x16xf32>
    %93 = vector.broadcast %9 : vector<1x16xf32> to vector<8x16xf32>
    %94 = arith.addf %92, %93 : vector<8x16xf32>
    %cst_46 = arith.constant 2.500000e-01 : f32
    %95 = vector.broadcast %cst_46 : f32 to vector<8x16xf32>
    %96 = arith.mulf %94, %95 : vector<8x16xf32>
    %97 = vector.extract_strided_slice %5 {offsets = [0, 16], sizes = [8, 16], strides = [1, 1]} : vector<8x64xf32> to vector<8x16xf32>
    %cst_47 = arith.constant dense<0.000000e+00> : vector<8xf32>
    %98 = vector.multi_reduction <add>, %97, %cst_47 [1] : vector<8x16xf32> to vector<8xf32>
    %99 = vector.shape_cast %98 : vector<8xf32> to vector<8x1xf32>
    %cst_48 = arith.constant 1.600000e+01 : f32
    %100 = vector.broadcast %cst_48 : f32 to vector<8x1xf32>
    %101 = arith.divf %99, %100 : vector<8x1xf32>
    %102 = vector.broadcast %101 : vector<8x1xf32> to vector<8x16xf32>
    %103 = arith.subf %97, %102 : vector<8x16xf32>
    %104 = arith.mulf %103, %103 : vector<8x16xf32>
    %cst_49 = arith.constant dense<0.000000e+00> : vector<8xf32>
    %105 = vector.multi_reduction <add>, %104, %cst_49 [1] : vector<8x16xf32> to vector<8xf32>
    %106 = vector.shape_cast %105 : vector<8xf32> to vector<8x1xf32>
    %cst_50 = arith.constant 1.600000e+01 : f32
    %107 = vector.broadcast %cst_50 : f32 to vector<8x1xf32>
    %108 = arith.divf %106, %107 : vector<8x1xf32>
    %109 = vector.broadcast %101 : vector<8x1xf32> to vector<8x16xf32>
    %110 = arith.subf %97, %109 : vector<8x16xf32>
    %cst_51 = arith.constant 9.99999997E-7 : f32
    %111 = vector.broadcast %cst_51 : f32 to vector<8x1xf32>
    %112 = arith.addf %108, %111 : vector<8x1xf32>
    %113 = math.rsqrt %112 : vector<8x1xf32>
    %114 = vector.broadcast %113 : vector<8x1xf32> to vector<8x16xf32>
    %115 = arith.mulf %110, %114 : vector<8x16xf32>
    %116 = vector.broadcast %8 : vector<1x16xf32> to vector<8x16xf32>
    %117 = arith.mulf %115, %116 : vector<8x16xf32>
    %118 = vector.broadcast %9 : vector<1x16xf32> to vector<8x16xf32>
    %119 = arith.addf %117, %118 : vector<8x16xf32>
    %120 = vector.extract_strided_slice %7 {offsets = [0, 8], sizes = [8, 8], strides = [1, 1]} : vector<8x32xf32> to vector<8x8xf32>
    %c0_52 = arith.constant 0 : index
    %c1 = arith.constant 1 : index
    %c0_53 = arith.constant 0 : index
    %c0_54 = arith.constant 0 : index
    %121 = vector.load %arg8[%c0_52, %c1, %c0_53, %c0_54] : memref<1x4x8x16xf32, #tpu.memory_space<vmem>>, vector<1x1x8x16xf32>
    %122 = vector.shape_cast %121 : vector<1x1x8x16xf32> to vector<8x16xf32>
    %123 = vector.shape_cast %96 : vector<8x16xf32> to vector<1x1x8x16xf32>
    tpu.vector_store %arg8[%c0_52, %c1, %c0_53, %c0_54], %123 {strides = array<i32>} : memref<1x4x8x16xf32, #tpu.memory_space<vmem>>, vector<1x1x8x16xf32>,
    %c0_55 = arith.constant 0 : index
    %c1_56 = arith.constant 1 : index
    %c0_57 = arith.constant 0 : index
    %c0_58 = arith.constant 0 : index
    %124 = vector.load %arg9[%c0_55, %c1_56, %c0_57, %c0_58] : memref<1x4x8x16xf32, #tpu.memory_space<vmem>>, vector<1x1x8x16xf32>
    %125 = vector.shape_cast %124 : vector<1x1x8x16xf32> to vector<8x16xf32>
    %126 = vector.shape_cast %119 : vector<8x16xf32> to vector<1x1x8x16xf32>
    tpu.vector_store %arg9[%c0_55, %c1_56, %c0_57, %c0_58], %126 {strides = array<i32>} : memref<1x4x8x16xf32, #tpu.memory_space<vmem>>, vector<1x1x8x16xf32>,
    %c0_59 = arith.constant 0 : index
    %c1_60 = arith.constant 1 : index
    %c0_61 = arith.constant 0 : index
    %c0_62 = arith.constant 0 : index
    %127 = vector.load %arg10[%c0_59, %c1_60, %c0_61, %c0_62] : memref<1x4x8x9xf32, #tpu.memory_space<vmem>>, vector<1x1x8x8xf32>
    %128 = vector.shape_cast %127 : vector<1x1x8x8xf32> to vector<8x8xf32>
    %129 = vector.shape_cast %120 : vector<8x8xf32> to vector<1x1x8x8xf32>
    tpu.vector_store %arg10[%c0_59, %c1_60, %c0_61, %c0_62], %129 {strides = array<i32>} : memref<1x4x8x9xf32, #tpu.memory_space<vmem>>, vector<1x1x8x8xf32>,
    %c0_63 = arith.constant 0 : index
    %c1_64 = arith.constant 1 : index
    %c0_65 = arith.constant 0 : index
    %c8_66 = arith.constant 8 : index
    %130 = vector.load %arg10[%c0_63, %c1_64, %c0_65, %c8_66] : memref<1x4x8x9xf32, #tpu.memory_space<vmem>>, vector<1x1x8x1xf32>
    %131 = vector.shape_cast %130 : vector<1x1x8x1xf32> to vector<8x1xf32>
    %132 = vector.shape_cast %10 : vector<8x1xf32> to vector<1x1x8x1xf32>
    tpu.vector_store %arg10[%c0_63, %c1_64, %c0_65, %c8_66], %132 {strides = array<i32>} : memref<1x4x8x9xf32, #tpu.memory_space<vmem>>, vector<1x1x8x1xf32>,
    %133 = vector.extract_strided_slice %3 {offsets = [0, 32], sizes = [8, 16], strides = [1, 1]} : vector<8x64xf32> to vector<8x16xf32>
    %cst_67 = arith.constant dense<0.000000e+00> : vector<8xf32>
    %134 = vector.multi_reduction <add>, %133, %cst_67 [1] : vector<8x16xf32> to vector<8xf32>
    %135 = vector.shape_cast %134 : vector<8xf32> to vector<8x1xf32>
    %cst_68 = arith.constant 1.600000e+01 : f32
    %136 = vector.broadcast %cst_68 : f32 to vector<8x1xf32>
    %137 = arith.divf %135, %136 : vector<8x1xf32>
    %138 = vector.broadcast %137 : vector<8x1xf32> to vector<8x16xf32>
    %139 = arith.subf %133, %138 : vector<8x16xf32>
    %140 = arith.mulf %139, %139 : vector<8x16xf32>
    %cst_69 = arith.constant dense<0.000000e+00> : vector<8xf32>
    %141 = vector.multi_reduction <add>, %140, %cst_69 [1] : vector<8x16xf32> to vector<8xf32>
    %142 = vector.shape_cast %141 : vector<8xf32> to vector<8x1xf32>
    %cst_70 = arith.constant 1.600000e+01 : f32
    %143 = vector.broadcast %cst_70 : f32 to vector<8x1xf32>
    %144 = arith.divf %142, %143 : vector<8x1xf32>
    %145 = vector.broadcast %137 : vector<8x1xf32> to vector<8x16xf32>
    %146 = arith.subf %133, %145 : vector<8x16xf32>
    %cst_71 = arith.constant 9.99999997E-7 : f32
    %147 = vector.broadcast %cst_71 : f32 to vector<8x1xf32>
    %148 = arith.addf %144, %147 : vector<8x1xf32>
    %149 = math.rsqrt %148 : vector<8x1xf32>
    %150 = vector.broadcast %149 : vector<8x1xf32> to vector<8x16xf32>
    %151 = arith.mulf %146, %150 : vector<8x16xf32>
    %152 = vector.broadcast %8 : vector<1x16xf32> to vector<8x16xf32>
    %153 = arith.mulf %151, %152 : vector<8x16xf32>
    %154 = vector.broadcast %9 : vector<1x16xf32> to vector<8x16xf32>
    %155 = arith.addf %153, %154 : vector<8x16xf32>
    %cst_72 = arith.constant 2.500000e-01 : f32
    %156 = vector.broadcast %cst_72 : f32 to vector<8x16xf32>
    %157 = arith.mulf %155, %156 : vector<8x16xf32>
    %158 = vector.extract_strided_slice %5 {offsets = [0, 32], sizes = [8, 16], strides = [1, 1]} : vector<8x64xf32> to vector<8x16xf32>
    %cst_73 = arith.constant dense<0.000000e+00> : vector<8xf32>
    %159 = vector.multi_reduction <add>, %158, %cst_73 [1] : vector<8x16xf32> to vector<8xf32>
    %160 = vector.shape_cast %159 : vector<8xf32> to vector<8x1xf32>
    %cst_74 = arith.constant 1.600000e+01 : f32
    %161 = vector.broadcast %cst_74 : f32 to vector<8x1xf32>
    %162 = arith.divf %160, %161 : vector<8x1xf32>
    %163 = vector.broadcast %162 : vector<8x1xf32> to vector<8x16xf32>
    %164 = arith.subf %158, %163 : vector<8x16xf32>
    %165 = arith.mulf %164, %164 : vector<8x16xf32>
    %cst_75 = arith.constant dense<0.000000e+00> : vector<8xf32>
    %166 = vector.multi_reduction <add>, %165, %cst_75 [1] : vector<8x16xf32> to vector<8xf32>
    %167 = vector.shape_cast %166 : vector<8xf32> to vector<8x1xf32>
    %cst_76 = arith.constant 1.600000e+01 : f32
    %168 = vector.broadcast %cst_76 : f32 to vector<8x1xf32>
    %169 = arith.divf %167, %168 : vector<8x1xf32>
    %170 = vector.broadcast %162 : vector<8x1xf32> to vector<8x16xf32>
    %171 = arith.subf %158, %170 : vector<8x16xf32>
    %cst_77 = arith.constant 9.99999997E-7 : f32
    %172 = vector.broadcast %cst_77 : f32 to vector<8x1xf32>
    %173 = arith.addf %169, %172 : vector<8x1xf32>
    %174 = math.rsqrt %173 : vector<8x1xf32>
    %175 = vector.broadcast %174 : vector<8x1xf32> to vector<8x16xf32>
    %176 = arith.mulf %171, %175 : vector<8x16xf32>
    %177 = vector.broadcast %8 : vector<1x16xf32> to vector<8x16xf32>
    %178 = arith.mulf %176, %177 : vector<8x16xf32>
    %179 = vector.broadcast %9 : vector<1x16xf32> to vector<8x16xf32>
    %180 = arith.addf %178, %179 : vector<8x16xf32>
    %181 = vector.extract_strided_slice %7 {offsets = [0, 16], sizes = [8, 8], strides = [1, 1]} : vector<8x32xf32> to vector<8x8xf32>
    %c0_78 = arith.constant 0 : index
    %c2 = arith.constant 2 : index
    %c0_79 = arith.constant 0 : index
    %c0_80 = arith.constant 0 : index
    %182 = vector.load %arg8[%c0_78, %c2, %c0_79, %c0_80] : memref<1x4x8x16xf32, #tpu.memory_space<vmem>>, vector<1x1x8x16xf32>
    %183 = vector.shape_cast %182 : vector<1x1x8x16xf32> to vector<8x16xf32>
    %184 = vector.shape_cast %157 : vector<8x16xf32> to vector<1x1x8x16xf32>
    tpu.vector_store %arg8[%c0_78, %c2, %c0_79, %c0_80], %184 {strides = array<i32>} : memref<1x4x8x16xf32, #tpu.memory_space<vmem>>, vector<1x1x8x16xf32>,
    %c0_81 = arith.constant 0 : index
    %c2_82 = arith.constant 2 : index
    %c0_83 = arith.constant 0 : index
    %c0_84 = arith.constant 0 : index
    %185 = vector.load %arg9[%c0_81, %c2_82, %c0_83, %c0_84] : memref<1x4x8x16xf32, #tpu.memory_space<vmem>>, vector<1x1x8x16xf32>
    %186 = vector.shape_cast %185 : vector<1x1x8x16xf32> to vector<8x16xf32>
    %187 = vector.shape_cast %180 : vector<8x16xf32> to vector<1x1x8x16xf32>
    tpu.vector_store %arg9[%c0_81, %c2_82, %c0_83, %c0_84], %187 {strides = array<i32>} : memref<1x4x8x16xf32, #tpu.memory_space<vmem>>, vector<1x1x8x16xf32>,
    %c0_85 = arith.constant 0 : index
    %c2_86 = arith.constant 2 : index
    %c0_87 = arith.constant 0 : index
    %c0_88 = arith.constant 0 : index
    %188 = vector.load %arg10[%c0_85, %c2_86, %c0_87, %c0_88] : memref<1x4x8x9xf32, #tpu.memory_space<vmem>>, vector<1x1x8x8xf32>
    %189 = vector.shape_cast %188 : vector<1x1x8x8xf32> to vector<8x8xf32>
    %190 = vector.shape_cast %181 : vector<8x8xf32> to vector<1x1x8x8xf32>
    tpu.vector_store %arg10[%c0_85, %c2_86, %c0_87, %c0_88], %190 {strides = array<i32>} : memref<1x4x8x9xf32, #tpu.memory_space<vmem>>, vector<1x1x8x8xf32>,
    %c0_89 = arith.constant 0 : index
    %c2_90 = arith.constant 2 : index
    %c0_91 = arith.constant 0 : index
    %c8_92 = arith.constant 8 : index
    %191 = vector.load %arg10[%c0_89, %c2_90, %c0_91, %c8_92] : memref<1x4x8x9xf32, #tpu.memory_space<vmem>>, vector<1x1x8x1xf32>
    %192 = vector.shape_cast %191 : vector<1x1x8x1xf32> to vector<8x1xf32>
    %193 = vector.shape_cast %10 : vector<8x1xf32> to vector<1x1x8x1xf32>
    tpu.vector_store %arg10[%c0_89, %c2_90, %c0_91, %c8_92], %193 {strides = array<i32>} : memref<1x4x8x9xf32, #tpu.memory_space<vmem>>, vector<1x1x8x1xf32>,
    %194 = vector.extract_strided_slice %3 {offsets = [0, 48], sizes = [8, 16], strides = [1, 1]} : vector<8x64xf32> to vector<8x16xf32>
    %cst_93 = arith.constant dense<0.000000e+00> : vector<8xf32>
    %195 = vector.multi_reduction <add>, %194, %cst_93 [1] : vector<8x16xf32> to vector<8xf32>
    %196 = vector.shape_cast %195 : vector<8xf32> to vector<8x1xf32>
    %cst_94 = arith.constant 1.600000e+01 : f32
    %197 = vector.broadcast %cst_94 : f32 to vector<8x1xf32>
    %198 = arith.divf %196, %197 : vector<8x1xf32>
    %199 = vector.broadcast %198 : vector<8x1xf32> to vector<8x16xf32>
    %200 = arith.subf %194, %199 : vector<8x16xf32>
    %201 = arith.mulf %200, %200 : vector<8x16xf32>
    %cst_95 = arith.constant dense<0.000000e+00> : vector<8xf32>
    %202 = vector.multi_reduction <add>, %201, %cst_95 [1] : vector<8x16xf32> to vector<8xf32>
    %203 = vector.shape_cast %202 : vector<8xf32> to vector<8x1xf32>
    %cst_96 = arith.constant 1.600000e+01 : f32
    %204 = vector.broadcast %cst_96 : f32 to vector<8x1xf32>
    %205 = arith.divf %203, %204 : vector<8x1xf32>
    %206 = vector.broadcast %198 : vector<8x1xf32> to vector<8x16xf32>
    %207 = arith.subf %194, %206 : vector<8x16xf32>
    %cst_97 = arith.constant 9.99999997E-7 : f32
    %208 = vector.broadcast %cst_97 : f32 to vector<8x1xf32>
    %209 = arith.addf %205, %208 : vector<8x1xf32>
    %210 = math.rsqrt %209 : vector<8x1xf32>
    %211 = vector.broadcast %210 : vector<8x1xf32> to vector<8x16xf32>
    %212 = arith.mulf %207, %211 : vector<8x16xf32>
    %213 = vector.broadcast %8 : vector<1x16xf32> to vector<8x16xf32>
    %214 = arith.mulf %212, %213 : vector<8x16xf32>
    %215 = vector.broadcast %9 : vector<1x16xf32> to vector<8x16xf32>
    %216 = arith.addf %214, %215 : vector<8x16xf32>
    %cst_98 = arith.constant 2.500000e-01 : f32
    %217 = vector.broadcast %cst_98 : f32 to vector<8x16xf32>
    %218 = arith.mulf %216, %217 : vector<8x16xf32>
    %219 = vector.extract_strided_slice %5 {offsets = [0, 48], sizes = [8, 16], strides = [1, 1]} : vector<8x64xf32> to vector<8x16xf32>
    %cst_99 = arith.constant dense<0.000000e+00> : vector<8xf32>
    %220 = vector.multi_reduction <add>, %219, %cst_99 [1] : vector<8x16xf32> to vector<8xf32>
    %221 = vector.shape_cast %220 : vector<8xf32> to vector<8x1xf32>
    %cst_100 = arith.constant 1.600000e+01 : f32
    %222 = vector.broadcast %cst_100 : f32 to vector<8x1xf32>
    %223 = arith.divf %221, %222 : vector<8x1xf32>
    %224 = vector.broadcast %223 : vector<8x1xf32> to vector<8x16xf32>
    %225 = arith.subf %219, %224 : vector<8x16xf32>
    %226 = arith.mulf %225, %225 : vector<8x16xf32>
    %cst_101 = arith.constant dense<0.000000e+00> : vector<8xf32>
    %227 = vector.multi_reduction <add>, %226, %cst_101 [1] : vector<8x16xf32> to vector<8xf32>
    %228 = vector.shape_cast %227 : vector<8xf32> to vector<8x1xf32>
    %cst_102 = arith.constant 1.600000e+01 : f32
    %229 = vector.broadcast %cst_102 : f32 to vector<8x1xf32>
    %230 = arith.divf %228, %229 : vector<8x1xf32>
    %231 = vector.broadcast %223 : vector<8x1xf32> to vector<8x16xf32>
    %232 = arith.subf %219, %231 : vector<8x16xf32>
    %cst_103 = arith.constant 9.99999997E-7 : f32
    %233 = vector.broadcast %cst_103 : f32 to vector<8x1xf32>
    %234 = arith.addf %230, %233 : vector<8x1xf32>
    %235 = math.rsqrt %234 : vector<8x1xf32>
    %236 = vector.broadcast %235 : vector<8x1xf32> to vector<8x16xf32>
    %237 = arith.mulf %232, %236 : vector<8x16xf32>
    %238 = vector.broadcast %8 : vector<1x16xf32> to vector<8x16xf32>
    %239 = arith.mulf %237, %238 : vector<8x16xf32>
    %240 = vector.broadcast %9 : vector<1x16xf32> to vector<8x16xf32>
    %241 = arith.addf %239, %240 : vector<8x16xf32>
    %242 = vector.extract_strided_slice %7 {offsets = [0, 24], sizes = [8, 8], strides = [1, 1]} : vector<8x32xf32> to vector<8x8xf32>
    %c0_104 = arith.constant 0 : index
    %c3 = arith.constant 3 : index
    %c0_105 = arith.constant 0 : index
    %c0_106 = arith.constant 0 : index
    %243 = vector.load %arg8[%c0_104, %c3, %c0_105, %c0_106] : memref<1x4x8x16xf32, #tpu.memory_space<vmem>>, vector<1x1x8x16xf32>
    %244 = vector.shape_cast %243 : vector<1x1x8x16xf32> to vector<8x16xf32>
    %245 = vector.shape_cast %218 : vector<8x16xf32> to vector<1x1x8x16xf32>
    tpu.vector_store %arg8[%c0_104, %c3, %c0_105, %c0_106], %245 {strides = array<i32>} : memref<1x4x8x16xf32, #tpu.memory_space<vmem>>, vector<1x1x8x16xf32>,
    %c0_107 = arith.constant 0 : index
    %c3_108 = arith.constant 3 : index
    %c0_109 = arith.constant 0 : index
    %c0_110 = arith.constant 0 : index
    %246 = vector.load %arg9[%c0_107, %c3_108, %c0_109, %c0_110] : memref<1x4x8x16xf32, #tpu.memory_space<vmem>>, vector<1x1x8x16xf32>
    %247 = vector.shape_cast %246 : vector<1x1x8x16xf32> to vector<8x16xf32>
    %248 = vector.shape_cast %241 : vector<8x16xf32> to vector<1x1x8x16xf32>
    tpu.vector_store %arg9[%c0_107, %c3_108, %c0_109, %c0_110], %248 {strides = array<i32>} : memref<1x4x8x16xf32, #tpu.memory_space<vmem>>, vector<1x1x8x16xf32>,
    %c0_111 = arith.constant 0 : index
    %c3_112 = arith.constant 3 : index
    %c0_113 = arith.constant 0 : index
    %c0_114 = arith.constant 0 : index
    %249 = vector.load %arg10[%c0_111, %c3_112, %c0_113, %c0_114] : memref<1x4x8x9xf32, #tpu.memory_space<vmem>>, vector<1x1x8x8xf32>
    %250 = vector.shape_cast %249 : vector<1x1x8x8xf32> to vector<8x8xf32>
    %251 = vector.shape_cast %242 : vector<8x8xf32> to vector<1x1x8x8xf32>
    tpu.vector_store %arg10[%c0_111, %c3_112, %c0_113, %c0_114], %251 {strides = array<i32>} : memref<1x4x8x9xf32, #tpu.memory_space<vmem>>, vector<1x1x8x8xf32>,
    %c0_115 = arith.constant 0 : index
    %c3_116 = arith.constant 3 : index
    %c0_117 = arith.constant 0 : index
    %c8_118 = arith.constant 8 : index
    %252 = vector.load %arg10[%c0_115, %c3_116, %c0_117, %c8_118] : memref<1x4x8x9xf32, #tpu.memory_space<vmem>>, vector<1x1x8x1xf32>
    %253 = vector.shape_cast %252 : vector<1x1x8x1xf32> to vector<8x1xf32>
    %254 = vector.shape_cast %10 : vector<8x1xf32> to vector<1x1x8x1xf32>
    tpu.vector_store %arg10[%c0_115, %c3_116, %c0_117, %c8_118], %254 {strides = array<i32>} : memref<1x4x8x9xf32, #tpu.memory_space<vmem>>, vector<1x1x8x1xf32>,
    return
  }
  func.func @transform_0(%arg0: i32, %arg1: i32) -> (i32, i32, i32) {
    %c0_i32 = arith.constant 0 : i32
    %c0_i32_0 = arith.constant 0 : i32
    return %arg0, %arg1, %c0_i32 : i32, i32, i32
  }
  func.func @transform_1(%arg0: i32, %arg1: i32) -> (i32, i32) {
    %c0_i32 = arith.constant 0 : i32
    %c0_i32_0 = arith.constant 0 : i32
    %c0_i32_1 = arith.constant 0 : i32
    return %c0_i32, %c0_i32_0 : i32, i32
  }
  func.func @transform_2(%arg0: i32, %arg1: i32) -> (i32, i32) {
    %c0_i32 = arith.constant 0 : i32
    %c0_i32_0 = arith.constant 0 : i32
    %c0_i32_1 = arith.constant 0 : i32
    return %c0_i32, %c0_i32_0 : i32, i32
  }
  func.func @transform_3(%arg0: i32, %arg1: i32) -> (i32, i32) {
    %c0_i32 = arith.constant 0 : i32
    %c0_i32_0 = arith.constant 0 : i32
    %c0_i32_1 = arith.constant 0 : i32
    return %c0_i32, %c0_i32_0 : i32, i32
  }
  func.func @transform_4(%arg0: i32, %arg1: i32) -> (i32, i32) {
    %c0_i32 = arith.constant 0 : i32
    %c0_i32_0 = arith.constant 0 : i32
    %c0_i32_1 = arith.constant 0 : i32
    return %c0_i32, %c0_i32_0 : i32, i32
  }
  func.func @transform_5(%arg0: i32, %arg1: i32) -> (i32, i32) {
    %c0_i32 = arith.constant 0 : i32
    %c0_i32_0 = arith.constant 0 : i32
    %c0_i32_1 = arith.constant 0 : i32
    return %c0_i32, %c0_i32_0 : i32, i32
  }
  func.func @transform_6(%arg0: i32, %arg1: i32) -> (i32, i32, i32, i32) {
    %c0_i32 = arith.constant 0 : i32
    %c0_i32_0 = arith.constant 0 : i32
    %c0_i32_1 = arith.constant 0 : i32
    return %arg0, %c0_i32, %arg1, %c0_i32_0 : i32, i32, i32, i32
  }
  func.func @transform_7(%arg0: i32, %arg1: i32) -> (i32, i32, i32, i32) {
    %c0_i32 = arith.constant 0 : i32
    %c0_i32_0 = arith.constant 0 : i32
    %c0_i32_1 = arith.constant 0 : i32
    return %arg0, %c0_i32, %arg1, %c0_i32_0 : i32, i32, i32, i32
  }
  func.func @transform_8(%arg0: i32, %arg1: i32) -> (i32, i32, i32, i32) {
    %c0_i32 = arith.constant 0 : i32
    %c0_i32_0 = arith.constant 0 : i32
    %c0_i32_1 = arith.constant 0 : i32
    return %arg0, %c0_i32, %arg1, %c0_i32_0 : i32, i32, i32, i32
  }
}

</mosaic_0001>

<llo_original>
// kernel: tpu_custom_call.1
$region0: #{tpu_custom_call.1}
  #allocation0 [shape = 'u32[]', space=smem, size = 0x4, offset = 0x4, fixed_abs, tag = 'smem constant byte address 0x4 - core index']
  #allocation1 [shape = 'u32[144,128]{1,0:T(1,128)}', space=vmem, size = 0x12000, scoped, tag = 'internal scratch']
  %s0 = inlined_call_operand.hbm [shape: f32[2,8,32], index: 0, kind: input, shape index: {}]
  %s1 = inlined_call_operand.hbm [shape: f32[32,64], index: 1, kind: input, shape index: {}]
  %s2 = inlined_call_operand.hbm [shape: f32[32,64], index: 2, kind: input, shape index: {}]
  %s3 = inlined_call_operand.hbm [shape: f32[32,32], index: 3, kind: input, shape index: {}]
  %s4 = inlined_call_operand.vmem [shape: f32[1,16], index: 4, kind: input, shape index: {}]
  %s5 = inlined_call_operand.vmem [shape: f32[1,16], index: 5, kind: input, shape index: {}]
  %s6 = inlined_call_operand.hbm [shape: f32[2,4,8,16], index: 6, kind: output, shape index: {0}]
  %s7 = inlined_call_operand.hbm [shape: f32[2,4,8,16], index: 7, kind: output, shape index: {1}]
  %s8 = inlined_call_operand.hbm [shape: f32[2,4,8,9], index: 8, kind: output, shape index: {2}]
  %9 = xla_tuple %s6, %s7, %s8
  %s10 = sld [smem:[#allocation0]]
  $region89: #{tpu_custom_call.1} parent=0
    _
  %s12 = ssub.s32 1, %s10
  %s13 = scalar_select 0, %s12, %s10
  $region1: #{tpu_custom_call.1} parent=0
    #allocation2 [shape = 'u8[8192]{0}', space=vmem, size = 0x2000, scoped, tag = 'input window, operand 0']
    #allocation3 [shape = 's32[2]{0}', space=sflag, size = 0x8, scoped, tag = 'scoped memory for tpu_custom_call.1']
    #allocation4 [shape = 's32[2]{0}', space=sflag, size = 0x8, scoped, tag = 'scoped memory for tpu_custom_call.1']
    #allocation5 [shape = 'u8[16384]{0}', space=vmem, size = 0x4000, scoped, tag = 'input window, operand 1, single buffered']
    #allocation6 [shape = 's32[1]{0}', space=sflag, size = 0x4, scoped, tag = 'scoped memory for tpu_custom_call.1']
    #allocation7 [shape = 'u8[16384]{0}', space=vmem, size = 0x4000, scoped, tag = 'input window, operand 2, single buffered']
    #allocation8 [shape = 'u8[16384]{0}', space=vmem, size = 0x4000, scoped, tag = 'input window, operand 3, single buffered']
    #allocation9 [shape = 's32[1]{0}', space=sflag, size = 0x4, scoped, tag = 'scoped memory for tpu_custom_call.1']
    #allocation10 [shape = 'u8[32768]{0}', space=vmem, size = 0x8000, scoped, tag = 'output window, operand 0']
    #allocation11 [shape = 'u8[32768]{0}', space=vmem, size = 0x8000, scoped, tag = 'output window, operand 1']
    #allocation12 [shape = 's32[2]{0}', space=sflag, size = 0x8, scoped, tag = 'scoped memory for tpu_custom_call.1']
    #allocation13 [shape = 'u8[32768]{0}', space=vmem, size = 0x8000, scoped, tag = 'output window, operand 2']
    %14 = vsyncpa [#allocation3], 0
    %s15 = scalar_lea.sflag [#allocation3], 1
    %16 = vsyncpa %s15, 0
    %17 = vsyncpa [#allocation6], 0
    %18 = vsyncpa [#allocation9], 0
    %19 = vsyncpa [#allocation4], 0
    %s20 = scalar_lea.sflag [#allocation4], 1
    %21 = vsyncpa %s20, 0
    %22 = vsyncpa [#allocation12], 0
    %s23 = scalar_lea.sflag [#allocation12], 1
    %24 = vsyncpa %s23, 0
    loop: start=0, step=1, limit=4
    $region2: #{tpu_custom_call.1} parent=1 // loop_pre_header
      _
    $region3: #{tpu_custom_call.1} parent=1 // loop_header
      %s26 = sphi 0, %s30
      %p27 = scmp.ge.s32.totalorder %s26, 4
      %s33 = sphi 0, %s45
      %s34 = sphi 0, %s41
      %s35 = sphi 0, %s33
      %s36 = sphi 0, %s34
      %s37 = sphi 0, %s35
      %s38 = sphi 0, %s36
      %s50 = sphi 0, %s52
      %s53 = sphi 0, %s50
      %s54 = sphi 0, %s53
      %s70 = sphi 0, %s54
      %s74 = sphi 0, %s74
      %s76 = sphi 0, %s74
      %s77 = sphi 0, %s76
      %s91 = sphi 0, %s77
      %s95 = sphi 0, %s95
      %s97 = sphi 0, %s95
      %s98 = sphi 0, %s97
      %s112 = sphi 0, %s98
      %s116 = sphi 0, %s116
      %s118 = sphi 0, %s116
      %s119 = sphi 0, %s118
      %s133 = sphi 0, %s119
      %s137 = sphi 0, %s137
      %s139 = sphi 0, %s137
      %s140 = sphi 0, %s139
      %s154 = sphi 0, %s140
      %s158 = sphi 0, %s158
      %s160 = sphi 0, %s158
      %s161 = sphi 0, %s160
      %s175 = sphi 0, %s161
      %s183 = sphi 0, %s185
      %s186 = sphi 0, %s183
      %s187 = sphi 0, %s186
      %s203 = sphi 0, %s187
      %s211 = sphi 0, %s213
      %s214 = sphi 0, %s211
      %s215 = sphi 0, %s214
      %s231 = sphi 0, %s215
      %s239 = sphi 0, %s241
      %s242 = sphi 0, %s239
      %s243 = sphi 0, %s242
      %s259 = sphi 0, %s243
    $region4: #{tpu_custom_call.1} parent=1 // loop_header_branch
      %29 = sbr.rel (%p27) target = $region8
    $region5: #{tpu_custom_call.1} parent=1 // loop_body
      %s31 = ssub.s32 %s26, 1
      %s32 = ssub.s32 %s26, 2
      %s39 = sadd.s32 1, %s34
      %p40 = scmp.ge.s32.totalorder %s39, 1
      %s41 = scalar_select %p40, 0, %s39
      %s42 = sadd.s32 1, %s33
      %s43 = scalar_select %p40, %s42, %s33
      %p44 = scmp.ge.s32.totalorder %s43, 2
      %s45 = scalar_select %p44, 0, %s43
      %s46 = ssub.s32 %s33, %s45
      %s47 = ssub.s32 %s34, %s41
      %s48 = sor.u32 %s46, %s47
      %p49 = scmp.eq.s32.totalorder %s48, 0
      %s51 = sadd.s32 %s50, 1
      %s52 = scalar_select %p49, %s50, %s51
      %p55 = pneg %p49
      %p56 = scmp.eq.s32.totalorder %s26, 1
      %p57 = por %p55, %p56
      %p58 = scmp.ne.s32.totalorder %s50, %s53
      %p59 = scmp.eq.s32.totalorder %s26, 0
      %p60 = por %p58, %p59
      %p61 = scmp.ne.s32.totalorder %s50, %s53
      %p62 = scmp.eq.s32.totalorder %s31, 1
      %p63 = por %p61, %p62
      %p64 = scmp.ne.s32.totalorder %s53, %s54
      %p65 = scmp.eq.s32.totalorder %s31, 0
      %p66 = por %p64, %p65
      %p67 = scmp.ne.s32.totalorder %s53, %s54
      %p68 = scmp.eq.s32.totalorder %s32, 1
      %p69 = por %p67, %p68
      %p71 = scmp.ne.s32.totalorder %s54, %s70
      %p72 = scmp.eq.s32.totalorder %s32, 0
      %p73 = por %p71, %p72
      %s75 = sadd.s32 %s74, 1
      %p78 = scmp.eq.s32.totalorder %s26, 1
      %p79 = scmp.ne.s32.totalorder %s74, %s76
      %p80 = scmp.eq.s32.totalorder %s26, 0
      %p81 = por %p79, %p80
      %p82 = scmp.ne.s32.totalorder %s74, %s76
      %p83 = scmp.eq.s32.totalorder %s31, 1
      %p84 = por %p82, %p83
      %p85 = scmp.ne.s32.totalorder %s76, %s77
      %p86 = scmp.eq.s32.totalorder %s31, 0
      %p87 = por %p85, %p86
      %p88 = scmp.ne.s32.totalorder %s76, %s77
      %p89 = scmp.eq.s32.totalorder %s32, 1
      %p90 = por %p88, %p89
      %p92 = scmp.ne.s32.totalorder %s77, %s91
      %p93 = scmp.eq.s32.totalorder %s32, 0
      %p94 = por %p92, %p93
      %s96 = sadd.s32 %s95, 1
      %p99 = scmp.eq.s32.totalorder %s26, 1
      %p100 = scmp.ne.s32.totalorder %s95, %s97
      %p101 = scmp.eq.s32.totalorder %s26, 0
      %p102 = por %p100, %p101
      %p103 = scmp.ne.s32.totalorder %s95, %s97
      %p104 = scmp.eq.s32.totalorder %s31, 1
      %p105 = por %p103, %p104
      %p106 = scmp.ne.s32.totalorder %s97, %s98
      %p107 = scmp.eq.s32.totalorder %s31, 0
      %p108 = por %p106, %p107
      %p109 = scmp.ne.s32.totalorder %s97, %s98
      %p110 = scmp.eq.s32.totalorder %s32, 1
      %p111 = por %p109, %p110
      %p113 = scmp.ne.s32.totalorder %s98, %s112
      %p114 = scmp.eq.s32.totalorder %s32, 0
      %p115 = por %p113, %p114
      %s117 = sadd.s32 %s116, 1
      %p120 = scmp.eq.s32.totalorder %s26, 1
      %p121 = scmp.ne.s32.totalorder %s116, %s118
      %p122 = scmp.eq.s32.totalorder %s26, 0
      %p123 = por %p121, %p122
      %p124 = scmp.ne.s32.totalorder %s116, %s118
      %p125 = scmp.eq.s32.totalorder %s31, 1
      %p126 = por %p124, %p125
      %p127 = scmp.ne.s32.totalorder %s118, %s119
      %p128 = scmp.eq.s32.totalorder %s31, 0
      %p129 = por %p127, %p128
      %p130 = scmp.ne.s32.totalorder %s118, %s119
      %p131 = scmp.eq.s32.totalorder %s32, 1
      %p132 = por %p130, %p131
      %p134 = scmp.ne.s32.totalorder %s119, %s133
      %p135 = scmp.eq.s32.totalorder %s32, 0
      %p136 = por %p134, %p135
      %s138 = sadd.s32 %s137, 1
      %p141 = scmp.eq.s32.totalorder %s26, 1
      %p142 = scmp.ne.s32.totalorder %s137, %s139
      %p143 = scmp.eq.s32.totalorder %s26, 0
      %p144 = por %p142, %p143
      %p145 = scmp.ne.s32.totalorder %s137, %s139
      %p146 = scmp.eq.s32.totalorder %s31, 1
      %p147 = por %p145, %p146
      %p148 = scmp.ne.s32.totalorder %s139, %s140
      %p149 = scmp.eq.s32.totalorder %s31, 0
      %p150 = por %p148, %p149
      %p151 = scmp.ne.s32.totalorder %s139, %s140
      %p152 = scmp.eq.s32.totalorder %s32, 1
      %p153 = por %p151, %p152
      %p155 = scmp.ne.s32.totalorder %s140, %s154
      %p156 = scmp.eq.s32.totalorder %s32, 0
      %p157 = por %p155, %p156
      %s159 = sadd.s32 %s158, 1
      %p162 = scmp.eq.s32.totalorder %s26, 1
      %p163 = scmp.ne.s32.totalorder %s158, %s160
      %p164 = scmp.eq.s32.totalorder %s26, 0
      %p165 = por %p163, %p164
      %p166 = scmp.ne.s32.totalorder %s158, %s160
      %p167 = scmp.eq.s32.totalorder %s31, 1
      %p168 = por %p166, %p167
      %p169 = scmp.ne.s32.totalorder %s160, %s161
      %p170 = scmp.eq.s32.totalorder %s31, 0
      %p171 = por %p169, %p170
      %p172 = scmp.ne.s32.totalorder %s160, %s161
      %p173 = scmp.eq.s32.totalorder %s32, 1
      %p174 = por %p172, %p173
      %p176 = scmp.ne.s32.totalorder %s161, %s175
      %p177 = scmp.eq.s32.totalorder %s32, 0
      %p178 = por %p176, %p177
      %s179 = ssub.s32 %s33, %s45
      %s180 = ssub.s32 %s34, %s41
      %s181 = sor.u32 %s179, %s180
      %p182 = scmp.eq.s32.totalorder %s181, 0
      %s184 = sadd.s32 %s183, 1
      %s185 = scalar_select %p182, %s183, %s184
      %p188 = pneg %p182
      %p189 = scmp.eq.s32.totalorder %s26, 1
      %p190 = por %p188, %p189
      %p191 = scmp.ne.s32.totalorder %s183, %s186
      %p192 = scmp.eq.s32.totalorder %s26, 0
      %p193 = por %p191, %p192
      %p194 = scmp.ne.s32.totalorder %s183, %s186
      %p195 = scmp.eq.s32.totalorder %s31, 1
      %p196 = por %p194, %p195
      %p197 = scmp.ne.s32.totalorder %s186, %s187
      %p198 = scmp.eq.s32.totalorder %s31, 0
      %p199 = por %p197, %p198
      %p200 = scmp.ne.s32.totalorder %s186, %s187
      %p201 = scmp.eq.s32.totalorder %s32, 1
      %p202 = por %p200, %p201
      %p204 = scmp.ne.s32.totalorder %s187, %s203
      %p205 = scmp.eq.s32.totalorder %s32, 0
      %p206 = por %p204, %p205
      %s207 = ssub.s32 %s33, %s45
      %s208 = ssub.s32 %s34, %s41
      %s209 = sor.u32 %s207, %s208
      %p210 = scmp.eq.s32.totalorder %s209, 0
      %s212 = sadd.s32 %s211, 1
      %s213 = scalar_select %p210, %s211, %s212
      %p216 = pneg %p210
      %p217 = scmp.eq.s32.totalorder %s26, 1
      %p218 = por %p216, %p217
      %p219 = scmp.ne.s32.totalorder %s211, %s214
      %p220 = scmp.eq.s32.totalorder %s26, 0
      %p221 = por %p219, %p220
      %p222 = scmp.ne.s32.totalorder %s211, %s214
      %p223 = scmp.eq.s32.totalorder %s31, 1
      %p224 = por %p222, %p223
      %p225 = scmp.ne.s32.totalorder %s214, %s215
      %p226 = scmp.eq.s32.totalorder %s31, 0
      %p227 = por %p225, %p226
      %p228 = scmp.ne.s32.totalorder %s214, %s215
      %p229 = scmp.eq.s32.totalorder %s32, 1
      %p230 = por %p228, %p229
      %p232 = scmp.ne.s32.totalorder %s215, %s231
      %p233 = scmp.eq.s32.totalorder %s32, 0
      %p234 = por %p232, %p233
      %s235 = ssub.s32 %s33, %s45
      %s236 = ssub.s32 %s34, %s41
      %s237 = sor.u32 %s235, %s236
      %p238 = scmp.eq.s32.totalorder %s237, 0
      %s240 = sadd.s32 %s239, 1
      %s241 = scalar_select %p238, %s239, %s240
      %p244 = pneg %p238
      %p245 = scmp.eq.s32.totalorder %s26, 1
      %p246 = por %p244, %p245
      %p247 = scmp.ne.s32.totalorder %s239, %s242
      %p248 = scmp.eq.s32.totalorder %s26, 0
      %p249 = por %p247, %p248
      %p250 = scmp.ne.s32.totalorder %s239, %s242
      %p251 = scmp.eq.s32.totalorder %s31, 1
      %p252 = por %p250, %p251
      %p253 = scmp.ne.s32.totalorder %s242, %s243
      %p254 = scmp.eq.s32.totalorder %s31, 0
      %p255 = por %p253, %p254
      %p256 = scmp.ne.s32.totalorder %s242, %s243
      %p257 = scmp.eq.s32.totalorder %s32, 1
      %p258 = por %p256, %p257
      %p260 = scmp.ne.s32.totalorder %s243, %s259
      %p261 = scmp.eq.s32.totalorder %s32, 0
      %p262 = por %p260, %p261
      %p263 = scmp.le.s32.totalorder 1, %s26
      %p264 = scmp.lt.s32.totalorder %s26, 3
      %p265 = pnand %p263, %p264
      %p266 = pneg %p265
      // Predicated region
      $region9: #{tpu_custom_call.1} parent=5 // pred_check
        _
      $region10: #{tpu_custom_call.1} parent=5 // pred_check_branch
        %268 = sbr.rel (%p265) target = $region12
      $region11: #{tpu_custom_call.1} parent=5 // pred_region
        %s269 = ssub.s32 %s26, 1
        // Predicated region
        $region13: #{tpu_custom_call.1} parent=11 // pred_check
          %p270 = pneg %p87
        $region14: #{tpu_custom_call.1} parent=11 // pred_check_branch
          %272 = sbr.rel (%p270) target = $region16
        $region15: #{tpu_custom_call.1} parent=11 // pred_region
          %s274 = ssub.s32 512, 512
          %275 = vsyncadd [#allocation6], %s274
          %s276 = sshll.u32 [#allocation5], 4
          %s277 = int_to_ptr.vmem [resolvable:$true] %s276
          %282 = dma.hbm_to_vmem [thread:$0]  %s1, 512, %s277, [#allocation6], 128, 128, 8
        $region16: #{tpu_custom_call.1} parent=11 // pred_fallthru
          _
        // Predicated region
        $region17: #{tpu_custom_call.1} parent=11 // pred_check
          %p283 = pneg %p108
        $region18: #{tpu_custom_call.1} parent=11 // pred_check_branch
          %285 = sbr.rel (%p283) target = $region20
        $region19: #{tpu_custom_call.1} parent=11 // pred_region
          %s287 = ssub.s32 512, 512
          %288 = vsyncadd [#allocation6], %s287
          %s289 = sshll.u32 [#allocation7], 4
          %s290 = int_to_ptr.vmem [resolvable:$true] %s289
          %295 = dma.hbm_to_vmem [thread:$0]  %s2, 512, %s290, [#allocation6], 128, 128, 8
        $region20: #{tpu_custom_call.1} parent=11 // pred_fallthru
          _
        // Predicated region
        $region21: #{tpu_custom_call.1} parent=11 // pred_check
          %p296 = pneg %p129
        $region22: #{tpu_custom_call.1} parent=11 // pred_check_branch
          %298 = sbr.rel (%p296) target = $region24
        $region23: #{tpu_custom_call.1} parent=11 // pred_region
          %s300 = ssub.s32 512, 512
          %301 = vsyncadd [#allocation9], %s300
          %s302 = sshll.u32 [#allocation8], 4
          %s303 = int_to_ptr.vmem [resolvable:$true] %s302
          %308 = dma.hbm_to_vmem [thread:$0]  %s3, 512, %s303, [#allocation9], 128, 128, 8
        $region24: #{tpu_custom_call.1} parent=11 // pred_fallthru
          _
        // Predicated region
        $region25: #{tpu_custom_call.1} parent=11 // pred_check
          %p309 = pneg %p150
        $region26: #{tpu_custom_call.1} parent=11 // pred_check_branch
          %311 = sbr.rel (%p309) target = $region28
        $region27: #{tpu_custom_call.1} parent=11 // pred_region
          _
        $region28: #{tpu_custom_call.1} parent=11 // pred_fallthru
          _
        // Predicated region
        $region29: #{tpu_custom_call.1} parent=11 // pred_check
          %p312 = pneg %p171
        $region30: #{tpu_custom_call.1} parent=11 // pred_check_branch
          %314 = sbr.rel (%p312) target = $region32
        $region31: #{tpu_custom_call.1} parent=11 // pred_region
          _
        $region32: #{tpu_custom_call.1} parent=11 // pred_fallthru
          _
      $region12: #{tpu_custom_call.1} parent=5 // pred_fallthru
        _
      %p315 = scmp.lt.s32.totalorder %s26, 2
      // Predicated region
      $region33: #{tpu_custom_call.1} parent=5 // pred_check
        %p316 = pneg %p315
      $region34: #{tpu_custom_call.1} parent=5 // pred_check_branch
        %318 = sbr.rel (%p316) target = $region36
      $region35: #{tpu_custom_call.1} parent=5 // pred_region
        // Predicated region
        $region37: #{tpu_custom_call.1} parent=35 // pred_check
          %p319 = pneg %p60
        $region38: #{tpu_custom_call.1} parent=35 // pred_check_branch
          %321 = sbr.rel (%p319) target = $region40
        $region39: #{tpu_custom_call.1} parent=35 // pred_region
          %s322 = sand.u32 %s50, 1
          %s323 = scalar_lea.sflag [#allocation3], %s322
          %s324 = sand.u32 %s50, 1
          %s325 = smul.addr %s324, 8
          %s326 = scalar_lea.vmem [#allocation2], %s325
          %s328 = ssub.s32 128, 128
          %329 = vsyncadd %s323, %s328
          %s330 = sadd.s32 %s34, %s33
          %s331 = smul.addr %s330, 128
          %s332 = scalar_lea.hbm %s0, %s331
          %s334 = sshll.u32 %s326, 4
          %s335 = int_to_ptr.vmem [resolvable:$true] %s334
          %337 = dma.hbm_to_vmem [thread:$0]  %s332, 128, %s335, %s323
        $region40: #{tpu_custom_call.1} parent=35 // pred_fallthru
          _
      $region36: #{tpu_custom_call.1} parent=5 // pred_fallthru
        _
      %p338 = scmp.le.s32.totalorder 1, %s26
      %p339 = scmp.lt.s32.totalorder %s26, 3
      %p340 = pnand %p338, %p339
      %p341 = pneg %p340
      // Predicated region
      $region41: #{tpu_custom_call.1} parent=5 // pred_check
        _
      $region42: #{tpu_custom_call.1} parent=5 // pred_check_branch
        %343 = sbr.rel (%p340) target = $region44
      $region43: #{tpu_custom_call.1} parent=5 // pred_region
        %s344 = ssub.s32 %s26, 1
        %s345 = sand.u32 %s53, 1
        %s346 = scalar_lea.sflag [#allocation3], %s345
        %s347 = sand.u32 %s53, 1
        %s348 = smul.addr %s347, 8
        %s349 = scalar_lea.vmem [#allocation2], %s348
        // Predicated region
        $region45: #{tpu_custom_call.1} parent=43 // pred_check
          %p350 = pneg %p66
        $region46: #{tpu_custom_call.1} parent=43 // pred_check_branch
          %352 = sbr.rel (%p350) target = $region48
        $region47: #{tpu_custom_call.1} parent=43 // pred_region
          %353 = dma.done %s346, 128
        $region48: #{tpu_custom_call.1} parent=43 // pred_fallthru
          _
        // Predicated region
        $region49: #{tpu_custom_call.1} parent=43 // pred_check
          %p354 = pneg %p87
        $region50: #{tpu_custom_call.1} parent=43 // pred_check_branch
          %356 = sbr.rel (%p354) target = $region52
        $region51: #{tpu_custom_call.1} parent=43 // pred_region
          %357 = dma.done [#allocation6], 512
        $region52: #{tpu_custom_call.1} parent=43 // pred_fallthru
          _
        // Predicated region
        $region53: #{tpu_custom_call.1} parent=43 // pred_check
          %p358 = pneg %p108
        $region54: #{tpu_custom_call.1} parent=43 // pred_check_branch
          %360 = sbr.rel (%p358) target = $region56
        $region55: #{tpu_custom_call.1} parent=43 // pred_region
          %361 = dma.done [#allocation6], 512
        $region56: #{tpu_custom_call.1} parent=43 // pred_fallthru
          _
        // Predicated region
        $region57: #{tpu_custom_call.1} parent=43 // pred_check
          %p362 = pneg %p129
        $region58: #{tpu_custom_call.1} parent=43 // pred_check_branch
          %364 = sbr.rel (%p362) target = $region60
        $region59: #{tpu_custom_call.1} parent=43 // pred_region
          %365 = dma.done [#allocation9], 512
        $region60: #{tpu_custom_call.1} parent=43 // pred_fallthru
          _
        %s366 = sand.u32 %s53, 1
        %s367 = scalar_lea.sflag [#allocation3], %s366
        %s368 = sand.u32 %s53, 1
        %s369 = smul.addr %s368, 8
        %s370 = scalar_lea.vmem [#allocation2], %s369
        %p371 = pneg %p66
        %p372 = pneg %p63
        %p373 = pneg %p87
        %p374 = pneg %p84
        %p375 = pneg %p108
        %p376 = pneg %p105
        %p377 = pneg %p129
        %p378 = pneg %p126
        %p379 = pneg %p150
        %p380 = pneg %p147
        %p381 = pneg %p171
        %p382 = pneg %p168
        %p383 = pneg %p199
        %p384 = pneg %p196
        %s385 = sand.u32 %s186, 1
        %s386 = scalar_lea.sflag [#allocation4], %s385
        %s387 = sand.u32 %s186, 1
        %s388 = smul.addr %s387, 32
        %s389 = scalar_lea.vmem [#allocation10], %s388
        %p390 = pneg %p227
        %p391 = pneg %p224
        %s392 = sand.u32 %s31, 1
        %s393 = scalar_lea.sflag [#allocation12], %s392
        %s394 = sand.u32 %s214, 1
        %s395 = smul.addr %s394, 32
        %s396 = scalar_lea.vmem [#allocation11], %s395
        %p397 = pneg %p255
        %p398 = pneg %p252
        %s399 = sand.u32 %s31, 1
        %s400 = scalar_lea.sflag [#allocation12], %s399
        %s401 = sand.u32 %s242, 1
        %s402 = smul.addr %s401, 32
        %s403 = scalar_lea.vmem [#allocation13], %s402
        %v404 = vld [vmem:[%s349] sm:$0xff]
        %v405 = vld [vmem:[#allocation5] sm:$0xff]
        %v406 = vld [vmem:[#allocation5 + $0x8] sm:$0xff]
        %v407 = vld [vmem:[#allocation5 + $0x10] sm:$0xff]
        %v408 = vld [vmem:[#allocation5 + $0x18] sm:$0xff]
        %vm409 = vcmask 261120
        %v411 = vsel %vm409, %v404, 0
        %413 = vmatprep.subr.mxu0 0.0
        %414 = vmatpush1.msra.mxu0 %v405
        %415 = vmatprep.subr.mxu0 0.0
        %416 = vmatpush1.msra.mxu0 %v406
        %417 = vmatprep.subr.mxu0 0.0
        %418 = vmatpush1.msra.mxu0 %v407
        %419 = vmatprep.subr.mxu0 0.0
        %420 = vmatpush1.msra.mxu0 %v408
        %421 = vmatprep.subr.mxu0 0.0
        %422 = vmatpush1.msra.mxu0 0.0
        %423 = vmatprep.subr.mxu0 0.0
        %424 = vmatpush1.msra.mxu0 0.0
        %425 = vmatprep.subr.mxu0 0.0
        %426 = vmatpush1.msra.mxu0 0.0
        %427 = vmatprep.subr.mxu0 0.0
        %428 = vmatpush1.msra.mxu0 0.0
        %429 = vmatprep.subr.mxu0 0.0
        %430 = vmatpush1.msra.mxu0 0.0
        %431 = vmatprep.subr.mxu0 0.0
        %432 = vmatpush1.msra.mxu0 0.0
        %433 = vmatprep.subr.mxu0 0.0
        %434 = vmatpush1.msra.mxu0 0.0
        %435 = vmatprep.subr.mxu0 0.0
        %436 = vmatpush1.msra.mxu0 0.0
        %437 = vmatprep.subr.mxu0 0.0
        %438 = vmatpush1.msra.mxu0 0.0
        %439 = vmatprep.subr.mxu0 0.0
        %440 = vmatpush1.msra.mxu0 0.0
        %441 = vmatprep.subr.mxu0 0.0
        %442 = vmatpush1.msra.mxu0 0.0
        %443 = vmatprep.subr.mxu0 0.0
        %444 = vmatpush1.msra.mxu0 0.0
        %445 = vmatprep.subr.mxu0 0.0
        %446 = vmatpush1.msra.mxu0 0.0
        %447 = vmatprep.subr.mxu0 0.0
        %448 = vmatpush1.msra.mxu0 0.0
        %449 = vmatprep.subr.mxu0 0.0
        %450 = vmatpush1.msra.mxu0 0.0
        %451 = vmatprep.subr.mxu0 0.0
        %452 = vmatpush1.msra.mxu0 0.0
        %453 = vmatprep.subr.mxu0 0.0
        %454 = vmatpush1.msra.mxu0 0.0
        %455 = vmatprep.subr.mxu0 0.0
        %456 = vmatpush1.msra.mxu0 0.0
        %457 = vmatprep.subr.mxu0 0.0
        %458 = vmatpush1.msra.mxu0 0.0
        %459 = vmatprep.subr.mxu0 0.0
        %460 = vmatpush1.msra.mxu0 0.0
        %461 = vmatprep.subr.mxu0 0.0
        %462 = vmatpush1.msra.mxu0 0.0
        %463 = vmatprep.subr.mxu0 0.0
        %464 = vmatpush1.msra.mxu0 0.0
        %465 = vmatprep.subr.mxu0 0.0
        %466 = vmatpush1.msra.mxu0 0.0
        %467 = vmatprep.subr.mxu0 0.0
        %468 = vmatpush1.msra.mxu0 0.0
        %469 = vmatprep.subr.mxu0 0.0
        %470 = vmatpush1.msra.mxu0 0.0
        %471 = vmatprep.subr.mxu0 0.0
        %472 = vmatpush1.msra.mxu0 0.0
        %473 = vmatprep.subr.mxu0 0.0
        %474 = vmatpush1.msra.mxu0 0.0
        %475 = vmatprep.subr.mxu0 0.0
        %476 = vmatpush1.msra.mxu0 0.0
        %477 = vmatprep.mubr.f32.mxu0 0.0
        %478 = vmatmul.mubr.f32.gmra.mrb[0].mxu0 %v411
        %v479 = vpop.f32.mrb[0].mxu0
        %v480 = vadd.f32 0.0, %v479
        %v481 = vpop.f32.mrb[0].mxu0
        %482 = vdwg.mxu0
        %v483 = vld [vmem:[#allocation7] sm:$0xff]
        %v484 = vld [vmem:[#allocation7 + $0x8] sm:$0xff]
        %v485 = vld [vmem:[#allocation7 + $0x10] sm:$0xff]
        %v486 = vld [vmem:[#allocation7 + $0x18] sm:$0xff]
        %487 = vmatprep.subr.mxu0 0.0
        %488 = vmatpush1.msra.mxu0 %v483
        %489 = vmatprep.subr.mxu0 0.0
        %490 = vmatpush1.msra.mxu0 %v484
        %491 = vmatprep.subr.mxu0 0.0
        %492 = vmatpush1.msra.mxu0 %v485
        %493 = vmatprep.subr.mxu0 0.0
        %494 = vmatpush1.msra.mxu0 %v486
        %495 = vmatprep.subr.mxu0 0.0
        %496 = vmatpush1.msra.mxu0 0.0
        %497 = vmatprep.subr.mxu0 0.0
        %498 = vmatpush1.msra.mxu0 0.0
        %499 = vmatprep.subr.mxu0 0.0
        %500 = vmatpush1.msra.mxu0 0.0
        %501 = vmatprep.subr.mxu0 0.0
        %502 = vmatpush1.msra.mxu0 0.0
        %503 = vmatprep.subr.mxu0 0.0
        %504 = vmatpush1.msra.mxu0 0.0
        %505 = vmatprep.subr.mxu0 0.0
        %506 = vmatpush1.msra.mxu0 0.0
        %507 = vmatprep.subr.mxu0 0.0
        %508 = vmatpush1.msra.mxu0 0.0
        %509 = vmatprep.subr.mxu0 0.0
        %510 = vmatpush1.msra.mxu0 0.0
        %511 = vmatprep.subr.mxu0 0.0
        %512 = vmatpush1.msra.mxu0 0.0
        %513 = vmatprep.subr.mxu0 0.0
        %514 = vmatpush1.msra.mxu0 0.0
        %515 = vmatprep.subr.mxu0 0.0
        %516 = vmatpush1.msra.mxu0 0.0
        %517 = vmatprep.subr.mxu0 0.0
        %518 = vmatpush1.msra.mxu0 0.0
        %519 = vmatprep.subr.mxu0 0.0
        %520 = vmatpush1.msra.mxu0 0.0
        %521 = vmatprep.subr.mxu0 0.0
        %522 = vmatpush1.msra.mxu0 0.0
        %523 = vmatprep.subr.mxu0 0.0
        %524 = vmatpush1.msra.mxu0 0.0
        %525 = vmatprep.subr.mxu0 0.0
        %526 = vmatpush1.msra.mxu0 0.0
        %527 = vmatprep.subr.mxu0 0.0
        %528 = vmatpush1.msra.mxu0 0.0
        %529 = vmatprep.subr.mxu0 0.0
        %530 = vmatpush1.msra.mxu0 0.0
        %531 = vmatprep.subr.mxu0 0.0
        %532 = vmatpush1.msra.mxu0 0.0
        %533 = vmatprep.subr.mxu0 0.0
        %534 = vmatpush1.msra.mxu0 0.0
        %535 = vmatprep.subr.mxu0 0.0
        %536 = vmatpush1.msra.mxu0 0.0
        %537 = vmatprep.subr.mxu0 0.0
        %538 = vmatpush1.msra.mxu0 0.0
        %539 = vmatprep.subr.mxu0 0.0
        %540 = vmatpush1.msra.mxu0 0.0
        %541 = vmatprep.subr.mxu0 0.0
        %542 = vmatpush1.msra.mxu0 0.0
        %543 = vmatprep.subr.mxu0 0.0
        %544 = vmatpush1.msra.mxu0 0.0
        %545 = vmatprep.subr.mxu0 0.0
        %546 = vmatpush1.msra.mxu0 0.0
        %547 = vmatprep.subr.mxu0 0.0
        %548 = vmatpush1.msra.mxu0 0.0
        %549 = vmatprep.subr.mxu0 0.0
        %550 = vmatpush1.msra.mxu0 0.0
        %551 = vmatprep.mubr.f32.mxu0 0.0
        %552 = vmatmul.mubr.f32.gmra.mrb[0].mxu0 %v411
        %v553 = vpop.f32.mrb[0].mxu0
        %v554 = vadd.f32 0.0, %v553
        %v555 = vpop.f32.mrb[0].mxu0
        %556 = vdwg.mxu0
        %v557 = vld [vmem:[#allocation8] sm:$0xff]
        %v558 = vld [vmem:[#allocation8 + $0x8] sm:$0xff]
        %v559 = vld [vmem:[#allocation8 + $0x10] sm:$0xff]
        %v560 = vld [vmem:[#allocation8 + $0x18] sm:$0xff]
        %561 = vmatprep.subr.mxu0 0.0
        %562 = vmatpush1.msra.mxu0 %v557
        %563 = vmatprep.subr.mxu0 0.0
        %564 = vmatpush1.msra.mxu0 %v558
        %565 = vmatprep.subr.mxu0 0.0
        %566 = vmatpush1.msra.mxu0 %v559
        %567 = vmatprep.subr.mxu0 0.0
        %568 = vmatpush1.msra.mxu0 %v560
        %569 = vmatprep.subr.mxu0 0.0
        %570 = vmatpush1.msra.mxu0 0.0
        %571 = vmatprep.subr.mxu0 0.0
        %572 = vmatpush1.msra.mxu0 0.0
        %573 = vmatprep.subr.mxu0 0.0
        %574 = vmatpush1.msra.mxu0 0.0
        %575 = vmatprep.subr.mxu0 0.0
        %576 = vmatpush1.msra.mxu0 0.0
        %577 = vmatprep.subr.mxu0 0.0
        %578 = vmatpush1.msra.mxu0 0.0
        %579 = vmatprep.subr.mxu0 0.0
        %580 = vmatpush1.msra.mxu0 0.0
        %581 = vmatprep.subr.mxu0 0.0
        %582 = vmatpush1.msra.mxu0 0.0
        %583 = vmatprep.subr.mxu0 0.0
        %584 = vmatpush1.msra.mxu0 0.0
        %585 = vmatprep.subr.mxu0 0.0
        %586 = vmatpush1.msra.mxu0 0.0
        %587 = vmatprep.subr.mxu0 0.0
        %588 = vmatpush1.msra.mxu0 0.0
        %589 = vmatprep.subr.mxu0 0.0
        %590 = vmatpush1.msra.mxu0 0.0
        %591 = vmatprep.subr.mxu0 0.0
        %592 = vmatpush1.msra.mxu0 0.0
        %593 = vmatprep.subr.mxu0 0.0
        %594 = vmatpush1.msra.mxu0 0.0
        %595 = vmatprep.subr.mxu0 0.0
        %596 = vmatpush1.msra.mxu0 0.0
        %597 = vmatprep.subr.mxu0 0.0
        %598 = vmatpush1.msra.mxu0 0.0
        %599 = vmatprep.subr.mxu0 0.0
        %600 = vmatpush1.msra.mxu0 0.0
        %601 = vmatprep.subr.mxu0 0.0
        %602 = vmatpush1.msra.mxu0 0.0
        %603 = vmatprep.subr.mxu0 0.0
        %604 = vmatpush1.msra.mxu0 0.0
        %605 = vmatprep.subr.mxu0 0.0
        %606 = vmatpush1.msra.mxu0 0.0
        %607 = vmatprep.subr.mxu0 0.0
        %608 = vmatpush1.msra.mxu0 0.0
        %609 = vmatprep.subr.mxu0 0.0
        %610 = vmatpush1.msra.mxu0 0.0
        %611 = vmatprep.subr.mxu0 0.0
        %612 = vmatpush1.msra.mxu0 0.0
        %613 = vmatprep.subr.mxu0 0.0
        %614 = vmatpush1.msra.mxu0 0.0
        %615 = vmatprep.subr.mxu0 0.0
        %616 = vmatpush1.msra.mxu0 0.0
        %617 = vmatprep.subr.mxu0 0.0
        %618 = vmatpush1.msra.mxu0 0.0
        %619 = vmatprep.subr.mxu0 0.0
        %620 = vmatpush1.msra.mxu0 0.0
        %621 = vmatprep.subr.mxu0 0.0
        %622 = vmatpush1.msra.mxu0 0.0
        %623 = vmatprep.subr.mxu0 0.0
        %624 = vmatpush1.msra.mxu0 0.0
        %625 = vmatprep.mubr.f32.mxu0 0.0
        %626 = vmatmul.mubr.f32.gmra.mrb[0].mxu0 %v411
        %v627 = vpop.f32.mrb[0].mxu0
        %v628 = vadd.f32 0.0, %v627
        %v629 = vpop.f32.mrb[0].mxu0
        %630 = vdwg.mxu0
        %v631 = vld [vmem:[%s4] sm:$0x1]
        %v632 = vld [vmem:[%s5] sm:$0x1]
        %vm633 = vcmask 130048
        %v634 = vsel %vm633, %v480, 0.0
        %635 = vadd.xlane.f32.xlu0 %v634
        %v636 = vpop.xlane.xlu0 %635
        %v637 = vrcp.pop 16.0
        %v638 = vmul.f32 %v636, %v637
        %v639 = vsub.f32 %v480, %v638
        %v640 = vmul.f32 %v639, %v639
        %v641 = vsel %vm633, %v640, 0.0
        %642 = vadd.xlane.f32.xlu0 %v641
        %v643 = vpop.xlane.xlu0 %642
        %v644 = vmul.f32 %v643, %v637
        %v645 = vadd.f32 %v644, 1e-06
        %v646 = vrsqrt.pop %v645
        %v647 = vmul.f32 %v639, %v646
        %v649 = vlaneseq
        %v650 = vshrl.u32 %v649, 7
        %v651 = vsub.s32 0, %v650
        %v652 = vrot.slane %v631, %v651
        %v654 = vmul.f32 %v647, %v652
        %v656 = vlaneseq
        %v657 = vshrl.u32 %v656, 7
        %v658 = vsub.s32 0, %v657
        %v659 = vrot.slane %v632, %v658
        %v661 = vadd.f32 %v654, %v659
        %v662 = vmul.f32 %v661, 0.25
        %v663 = vsel %vm633, %v554, 0.0
        %664 = vadd.xlane.f32.xlu0 %v663
        %v665 = vpop.xlane.xlu0 %664
        %v666 = vmul.f32 %v665, %v637
        %v667 = vsub.f32 %v554, %v666
        %v668 = vmul.f32 %v667, %v667
        %v669 = vsel %vm633, %v668, 0.0
        %670 = vadd.xlane.f32.xlu0 %v669
        %v671 = vpop.xlane.xlu0 %670
        %v672 = vmul.f32 %v671, %v637
        %v673 = vadd.f32 %v672, 1e-06
        %v674 = vrsqrt.pop %v673
        %v675 = vmul.f32 %v667, %v674
        %v676 = vmul.f32 %v675, %v652
        %v677 = vadd.f32 %v676, %v659
        %678 = vst.msk [vmem:[%s389] sm:$0xff] %vm633, %v662
        %679 = vst.msk [vmem:[%s396] sm:$0xff] %vm633, %v677
        %vm680 = vcmask 64512
        %681 = vst.msk [vmem:[%s403] sm:$0xff] %vm680, %v628
        %vm682 = vcmask 72768
        %683 = vst.msk [vmem:[%s403] sm:$0xff] %vm682, 1.0
        %685 = vrot.lane.b32.xlu0 %v480, 112
        %v686 = vpop.permute.xlu0 %685
        %v688 = vsel %vm633, %v686, 0.0
        %689 = vadd.xlane.f32.xlu0 %v688
        %v690 = vpop.xlane.xlu0 %689
        %v691 = vmul.f32 %v690, %v637
        %v692 = vsub.f32 %v480, %v691
        %v693 = vmul.f32 %v692, %v692
        %695 = vrot.lane.b32.xlu0 %v693, 112
        %v696 = vpop.permute.xlu0 %695
        %v698 = vsel %vm633, %v696, 0.0
        %699 = vadd.xlane.f32.xlu0 %v698
        %v700 = vpop.xlane.xlu0 %699
        %v701 = vmul.f32 %v700, %v637
        %v702 = vadd.f32 %v701, 1e-06
        %v703 = vrsqrt.pop %v702
        %v704 = vmul.f32 %v692, %v703
        %705 = vrot.lane.b32.xlu0 %v652, 16
        %v706 = vpop.permute.xlu0 %705
        %v708 = vmul.f32 %v704, %v706
        %709 = vrot.lane.b32.xlu0 %v659, 16
        %v710 = vpop.permute.xlu0 %709
        %v712 = vadd.f32 %v708, %v710
        %v713 = vmul.f32 %v712, 0.25
        %715 = vrot.lane.b32.xlu0 %v554, 112
        %v716 = vpop.permute.xlu0 %715
        %v718 = vsel %vm633, %v716, 0.0
        %719 = vadd.xlane.f32.xlu0 %v718
        %v720 = vpop.xlane.xlu0 %719
        %v721 = vmul.f32 %v720, %v637
        %v722 = vsub.f32 %v554, %v721
        %v723 = vmul.f32 %v722, %v722
        %725 = vrot.lane.b32.xlu0 %v723, 112
        %v726 = vpop.permute.xlu0 %725
        %v728 = vsel %vm633, %v726, 0.0
        %729 = vadd.xlane.f32.xlu0 %v728
        %v730 = vpop.xlane.xlu0 %729
        %v731 = vmul.f32 %v730, %v637
        %v732 = vadd.f32 %v731, 1e-06
        %v733 = vrsqrt.pop %v732
        %v734 = vmul.f32 %v722, %v733
        %v735 = vmul.f32 %v734, %v706
        %v736 = vadd.f32 %v735, %v710
        %738 = vrot.lane.b32.xlu0 %v713, 112
        %v739 = vpop.permute.xlu0 %738
        %s741 = scalar_lea.vmem %s389, 8 [#allocation10]
        %742 = vst.msk [vmem:[%s741] sm:$0xff] %vm633, %v739
        %744 = vrot.lane.b32.xlu0 %v736, 112
        %v745 = vpop.permute.xlu0 %744
        %s747 = scalar_lea.vmem %s396, 8 [#allocation11]
        %748 = vst.msk [vmem:[%s747] sm:$0xff] %vm633, %v745
        %750 = vrot.lane.b32.xlu0 %v628, 120
        %v751 = vpop.permute.xlu0 %750
        %s753 = scalar_lea.vmem %s403, 8 [#allocation13]
        %754 = vst.msk [vmem:[%s753] sm:$0xff] %vm680, %v751
        %755 = vst.msk [vmem:[%s753] sm:$0xff] %vm682, 1.0
        %756 = vrot.lane.b32.xlu0 %v480, 96
        %v757 = vpop.permute.xlu0 %756
        %v759 = vsel %vm633, %v757, 0.0
        %760 = vadd.xlane.f32.xlu0 %v759
        %v761 = vpop.xlane.xlu0 %760
        %v762 = vmul.f32 %v761, %v637
        %v763 = vsub.f32 %v480, %v762
        %v764 = vmul.f32 %v763, %v763
        %766 = vrot.lane.b32.xlu0 %v764, 96
        %v767 = vpop.permute.xlu0 %766
        %v769 = vsel %vm633, %v767, 0.0
        %770 = vadd.xlane.f32.xlu0 %v769
        %v771 = vpop.xlane.xlu0 %770
        %v772 = vmul.f32 %v771, %v637
        %v773 = vadd.f32 %v772, 1e-06
        %v774 = vrsqrt.pop %v773
        %v775 = vmul.f32 %v763, %v774
        %776 = vrot.lane.b32.xlu0 %v652, 32
        %v777 = vpop.permute.xlu0 %776
        %v779 = vmul.f32 %v775, %v777
        %780 = vrot.lane.b32.xlu0 %v659, 32
        %v781 = vpop.permute.xlu0 %780
        %v783 = vadd.f32 %v779, %v781
        %v784 = vmul.f32 %v783, 0.25
        %785 = vrot.lane.b32.xlu0 %v554, 96
        %v786 = vpop.permute.xlu0 %785
        %v788 = vsel %vm633, %v786, 0.0
        %789 = vadd.xlane.f32.xlu0 %v788
        %v790 = vpop.xlane.xlu0 %789
        %v791 = vmul.f32 %v790, %v637
        %v792 = vsub.f32 %v554, %v791
        %v793 = vmul.f32 %v792, %v792
        %795 = vrot.lane.b32.xlu0 %v793, 96
        %v796 = vpop.permute.xlu0 %795
        %v798 = vsel %vm633, %v796, 0.0
        %799 = vadd.xlane.f32.xlu0 %v798
        %v800 = vpop.xlane.xlu0 %799
        %v801 = vmul.f32 %v800, %v637
        %v802 = vadd.f32 %v801, 1e-06
        %v803 = vrsqrt.pop %v802
        %v804 = vmul.f32 %v792, %v803
        %v805 = vmul.f32 %v804, %v777
        %v806 = vadd.f32 %v805, %v781
        %808 = vrot.lane.b32.xlu0 %v784, 96
        %v809 = vpop.permute.xlu0 %808
        %s811 = scalar_lea.vmem %s389, 16 [#allocation10]
        %812 = vst.msk [vmem:[%s811] sm:$0xff] %vm633, %v809
        %814 = vrot.lane.b32.xlu0 %v806, 96
        %v815 = vpop.permute.xlu0 %814
        %s817 = scalar_lea.vmem %s396, 16 [#allocation11]
        %818 = vst.msk [vmem:[%s817] sm:$0xff] %vm633, %v815
        %819 = vrot.lane.b32.xlu0 %v628, 112
        %v820 = vpop.permute.xlu0 %819
        %s822 = scalar_lea.vmem %s403, 16 [#allocation13]
        %823 = vst.msk [vmem:[%s822] sm:$0xff] %vm680, %v820
        %824 = vst.msk [vmem:[%s822] sm:$0xff] %vm682, 1.0
        %825 = vrot.lane.b32.xlu0 %v480, 80
        %v826 = vpop.permute.xlu0 %825
        %v828 = vsel %vm633, %v826, 0.0
        %829 = vadd.xlane.f32.xlu0 %v828
        %v830 = vpop.xlane.xlu0 %829
        %v831 = vmul.f32 %v830, %v637
        %v832 = vsub.f32 %v480, %v831
        %v833 = vmul.f32 %v832, %v832
        %835 = vrot.lane.b32.xlu0 %v833, 80
        %v836 = vpop.permute.xlu0 %835
        %v838 = vsel %vm633, %v836, 0.0
        %839 = vadd.xlane.f32.xlu0 %v838
        %v840 = vpop.xlane.xlu0 %839
        %v841 = vmul.f32 %v840, %v637
        %v842 = vadd.f32 %v841, 1e-06
        %v843 = vrsqrt.pop %v842
        %v844 = vmul.f32 %v832, %v843
        %845 = vrot.lane.b32.xlu0 %v652, 48
        %v846 = vpop.permute.xlu0 %845
        %v848 = vmul.f32 %v844, %v846
        %849 = vrot.lane.b32.xlu0 %v659, 48
        %v850 = vpop.permute.xlu0 %849
        %v852 = vadd.f32 %v848, %v850
        %v853 = vmul.f32 %v852, 0.25
        %854 = vrot.lane.b32.xlu0 %v554, 80
        %v855 = vpop.permute.xlu0 %854
        %v857 = vsel %vm633, %v855, 0.0
        %858 = vadd.xlane.f32.xlu0 %v857
        %v859 = vpop.xlane.xlu0 %858
        %v860 = vmul.f32 %v859, %v637
        %v861 = vsub.f32 %v554, %v860
        %v862 = vmul.f32 %v861, %v861
        %864 = vrot.lane.b32.xlu0 %v862, 80
        %v865 = vpop.permute.xlu0 %864
        %v867 = vsel %vm633, %v865, 0.0
        %868 = vadd.xlane.f32.xlu0 %v867
        %v869 = vpop.xlane.xlu0 %868
        %v870 = vmul.f32 %v869, %v637
        %v871 = vadd.f32 %v870, 1e-06
        %v872 = vrsqrt.pop %v871
        %v873 = vmul.f32 %v861, %v872
        %v874 = vmul.f32 %v873, %v846
        %v875 = vadd.f32 %v874, %v850
        %877 = vrot.lane.b32.xlu0 %v853, 80
        %v878 = vpop.permute.xlu0 %877
        %s880 = scalar_lea.vmem %s389, 24 [#allocation10]
        %881 = vst.msk [vmem:[%s880] sm:$0xff] %vm633, %v878
        %883 = vrot.lane.b32.xlu0 %v875, 80
        %v884 = vpop.permute.xlu0 %883
        %s886 = scalar_lea.vmem %s396, 24 [#allocation11]
        %887 = vst.msk [vmem:[%s886] sm:$0xff] %vm633, %v884
        %888 = vrot.lane.b32.xlu0 %v628, 104
        %v889 = vpop.permute.xlu0 %888
        %s891 = scalar_lea.vmem %s403, 24 [#allocation13]
        %892 = vst.msk [vmem:[%s891] sm:$0xff] %vm680, %v889
        %893 = vst.msk [vmem:[%s891] sm:$0xff] %vm682, 1.0
        %s894 = sand.u32 %s186, 1
        %s895 = scalar_lea.sflag [#allocation4], %s894
        %s896 = sand.u32 %s186, 1
        %s897 = smul.addr %s896, 32
        %s898 = scalar_lea.vmem [#allocation10], %s897
        %s899 = sand.u32 %s31, 1
        %s900 = scalar_lea.sflag [#allocation12], %s899
        %s901 = sand.u32 %s214, 1
        %s902 = smul.addr %s901, 32
        %s903 = scalar_lea.vmem [#allocation11], %s902
        %s904 = sand.u32 %s31, 1
        %s905 = scalar_lea.sflag [#allocation12], %s904
        %s906 = sand.u32 %s242, 1
        %s907 = smul.addr %s906, 32
        %s908 = scalar_lea.vmem [#allocation13], %s907
        // Predicated region
        $region61: #{tpu_custom_call.1} parent=43 // pred_check
          %p909 = pneg %p196
        $region62: #{tpu_custom_call.1} parent=43 // pred_check_branch
          %911 = sbr.rel (%p909) target = $region64
        $region63: #{tpu_custom_call.1} parent=43 // pred_region
          %s913 = ssub.s32 512, 512
          %914 = vsyncadd %s895, %s913
          %s915 = smul.addr %s35, 4
          %s916 = sadd.s32 %s36, %s915
          %s917 = smul.addr %s916, 128
          %s918 = scalar_lea.hbm %s6, %s917
          %s919 = sshll.u32 %s898, 4
          %s920 = int_to_ptr.vmem [resolvable:$true] %s919
          %925 = dma.vmem_to_hbm [thread:$0]  %s920, 512, %s918, %s895, 128, 128, 8
        $region64: #{tpu_custom_call.1} parent=43 // pred_fallthru
          _
        // Predicated region
        $region65: #{tpu_custom_call.1} parent=43 // pred_check
          %p926 = pneg %p224
        $region66: #{tpu_custom_call.1} parent=43 // pred_check_branch
          %928 = sbr.rel (%p926) target = $region68
        $region67: #{tpu_custom_call.1} parent=43 // pred_region
          %s930 = ssub.s32 512, 512
          %931 = vsyncadd %s900, %s930
          %s932 = smul.addr %s35, 4
          %s933 = sadd.s32 %s36, %s932
          %s934 = smul.addr %s933, 128
          %s935 = scalar_lea.hbm %s7, %s934
          %s936 = sshll.u32 %s903, 4
          %s937 = int_to_ptr.vmem [resolvable:$true] %s936
          %942 = dma.vmem_to_hbm [thread:$0]  %s937, 512, %s935, %s900, 128, 128, 8
        $region68: #{tpu_custom_call.1} parent=43 // pred_fallthru
          _
        // Predicated region
        $region69: #{tpu_custom_call.1} parent=43 // pred_check
          %p943 = pneg %p252
        $region70: #{tpu_custom_call.1} parent=43 // pred_check_branch
          %945 = sbr.rel (%p943) target = $region72
        $region71: #{tpu_custom_call.1} parent=43 // pred_region
          %s947 = ssub.s32 512, 512
          %948 = vsyncadd %s905, %s947
          %s949 = smul.addr %s35, 4
          %s950 = sadd.s32 %s36, %s949
          %s951 = smul.addr %s950, 128
          %s952 = scalar_lea.hbm %s8, %s951
          %s953 = sshll.u32 %s908, 4
          %s954 = int_to_ptr.vmem [resolvable:$true] %s953
          %959 = dma.vmem_to_hbm [thread:$0]  %s954, 512, %s952, %s905, 128, 128, 8
        $region72: #{tpu_custom_call.1} parent=43 // pred_fallthru
          _
      $region44: #{tpu_custom_call.1} parent=5 // pred_fallthru
        _
      %p960 = scmp.le.s32.totalorder 2, %s26
      // Predicated region
      $region73: #{tpu_custom_call.1} parent=5 // pred_check
        %p961 = pneg %p960
      $region74: #{tpu_custom_call.1} parent=5 // pred_check_branch
        %963 = sbr.rel (%p961) target = $region76
      $region75: #{tpu_custom_call.1} parent=5 // pred_region
        %s964 = ssub.s32 %s26, 2
        // Predicated region
        $region77: #{tpu_custom_call.1} parent=75 // pred_check
          %p965 = pneg %p202
        $region78: #{tpu_custom_call.1} parent=75 // pred_check_branch
          %967 = sbr.rel (%p965) target = $region80
        $region79: #{tpu_custom_call.1} parent=75 // pred_region
          %s968 = sand.u32 %s187, 1
          %s969 = scalar_lea.sflag [#allocation4], %s968
          %s970 = sand.u32 %s187, 1
          %s971 = smul.addr %s970, 32
          %s972 = scalar_lea.vmem [#allocation10], %s971
          %973 = dma.done %s969, 512
        $region80: #{tpu_custom_call.1} parent=75 // pred_fallthru
          _
        // Predicated region
        $region81: #{tpu_custom_call.1} parent=75 // pred_check
          %p974 = pneg %p230
        $region82: #{tpu_custom_call.1} parent=75 // pred_check_branch
          %976 = sbr.rel (%p974) target = $region84
        $region83: #{tpu_custom_call.1} parent=75 // pred_region
          %s977 = sand.u32 %s32, 1
          %s978 = scalar_lea.sflag [#allocation12], %s977
          %s979 = sand.u32 %s215, 1
          %s980 = smul.addr %s979, 32
          %s981 = scalar_lea.vmem [#allocation11], %s980
          %982 = dma.done %s978, 512
        $region84: #{tpu_custom_call.1} parent=75 // pred_fallthru
          _
        // Predicated region
        $region85: #{tpu_custom_call.1} parent=75 // pred_check
          %p983 = pneg %p258
        $region86: #{tpu_custom_call.1} parent=75 // pred_check_branch
          %985 = sbr.rel (%p983) target = $region88
        $region87: #{tpu_custom_call.1} parent=75 // pred_region
          %s986 = sand.u32 %s32, 1
          %s987 = scalar_lea.sflag [#allocation12], %s986
          %s988 = sand.u32 %s243, 1
          %s989 = smul.addr %s988, 32
          %s990 = scalar_lea.vmem [#allocation13], %s989
          %991 = dma.done %s987, 512
        $region88: #{tpu_custom_call.1} parent=75 // pred_fallthru
          _
      $region76: #{tpu_custom_call.1} parent=5 // pred_fallthru
        _
    $region6: #{tpu_custom_call.1} parent=1 // loop_footer
      %s30 = sadd.s32 1, %s26
    $region7: #{tpu_custom_call.1} parent=1 // loop_footer_branch
      %25 = sbr.rel target = $region3
    $region8: #{tpu_custom_call.1} parent=1 // loop_exit
      _
    %992 = vsyncpa [#allocation3], 1
    %s993 = scalar_lea.sflag [#allocation3], 1
    %994 = vsyncpa %s993, 1
    %995 = vsyncpa [#allocation6], 1
    %996 = vsyncpa [#allocation9], 1
    %997 = vsyncpa [#allocation4], 1
    %s998 = scalar_lea.sflag [#allocation4], 1
    %999 = vsyncpa %s998, 1
    %1000 = vsyncpa [#allocation12], 1
    %s1001 = scalar_lea.sflag [#allocation12], 1
    %1002 = vsyncpa %s1001, 1

</llo_original>
